<compile_context>
chip_gen: v7x
topology: tpu7x:2x2x1
jax: 0.10.0
libtpu: 0.0.40
codegen_flags: <defaults>
</compile_context>

<pallas_src>
import functools

import jax
import jax.numpy as jnp
from jax.experimental import pallas as pl
from jax.experimental.pallas import tpu as pltpu


def _round_up(x, m):
    return (x + m - 1) // m * m


def _default_batches_per_step(N):
    """Fold all batches into one grid step on single-TC chips (v5e/v6e); keep one
    batch per step on multi-TC chips so the 'parallel' axis splits across cores."""
    try:
        kind = jax.devices()[0].device_kind.lower()
    except Exception:
        return 1
    single_tc = any(s in kind for s in
                    ("v5e", "v5 lite", "v5lite", "v6e", "v6 lite", "v6lite", "trillium"))
    return N if single_tc else 1


def _conv3d_im2col_kernel(x_ref, w_ref, o_ref, cols_ref, *,
                          C_pad, Lq, PLANE, KD, n_hw, n_real, Kc, NB, hw_offsets):
    """One grid step: build the im2col operand for NB batches, then one MXU matmul.

    x_ref:    (NB, C_pad, Lp)   f32  padded input, channels-first, 128-strided D planes
    w_ref:    (C_out, Kc)       f32  tap-major weight slab (zero-padded to Kc columns)
    o_ref:    (NB, C_out, Lq)   f32  lane-dense output on the padded spatial grid
    cols_ref: (Kc, NB*Lq)       f32  VMEM scratch (im2col operand)
    """
    # Keep the zero-padded contraction rows inert (their weight columns are zero,
    # but stale VMEM could hold NaNs and NaN*0 would poison the output).
    if Kc > n_real:
        cols_ref[n_real:, :] = jnp.zeros((Kc - n_real, NB * Lq), dtype=cols_ref.dtype)

    slab_len = Lq + (KD - 1) * PLANE
    for b in range(NB):
        x = x_ref[b]                                  # (C_pad, Lp), stays in vregs
        for hw, off in enumerate(hw_offsets):         # KH*KW = 9 lane-unaligned slabs
            slab = x[:, off:off + slab_len]           # one lane-rotate, shared by KD taps
            for kd in range(KD):                      # kd taps: 128-aligned, rotation-free
                t = kd * n_hw + hw                    # tap-major order (kd, kh, kw)
                cols_ref[t * C_pad:(t + 1) * C_pad, b * Lq:(b + 1) * Lq] = (
                    slab[:, kd * PLANE:kd * PLANE + Lq])

    # Single lane-dense f32 matmul with f32 accumulation; output stores are unmasked.
    out = jnp.dot(w_ref[...], cols_ref[...], preferred_element_type=jnp.float32)
    for b in range(NB):                               # 128-aligned lane slices of `out`
        o_ref[b] = out[:, b * Lq:(b + 1) * Lq].astype(o_ref.dtype)


def conv3d_pallas(x_ncdhw, weight_oidhw, *, padding=1, stride=1, dilation=1,
                  groups=1, batches_per_step=None):
    """Conv3d, stride=1, dilation=1, groups=1, no bias (matches nn.Conv3d).

    x_ncdhw:      (N, C_in, D, H, W)
    weight_oidhw: (C_out, C_in, KD, KH, KW)
    returns:      (N, C_out, D_out, H_out, W_out)
    """
    N, C_in, D, H, W = x_ncdhw.shape
    C_out, C_in_w, KD, KH, KW = weight_oidhw.shape
    assert stride == 1 and dilation == 1 and groups == 1 and C_in == C_in_w

    Dp, Hp, Wp = D + 2 * padding, H + 2 * padding, W + 2 * padding
    D_out, H_out, W_out = Dp - KD + 1, Hp - KH + 1, Wp - KW + 1

    C_pad = _round_up(C_in, 8)          # full f32 sublane tile per tap -> unmasked stores
    PLANE = _round_up(Hp * Wp, 128)     # 128-aligned D stride -> kd taps need no rotate

    # Flattened padded-grid geometry: output column q = d*PLANE + h*Wp + w; tap
    # (kd,kh,kw) reads flat-input column q + kd*PLANE + kh*Wp + kw (no carries because
    # W_out+KW-1 <= Wp and Hp*Wp <= PLANE for stride=1, dilation=1).
    q_max = (D_out - 1) * PLANE + (H_out - 1) * Wp + (W_out - 1)
    max_off = (KD - 1) * PLANE + (KH - 1) * Wp + (KW - 1)
    Lq = _round_up(q_max + 1, 128)                              # lane-dense output columns
    Lp = _round_up(max(Lq + max_off, Dp * PLANE), 128)          # flat padded-input length
    # The reshape-based extraction below requires every valid output column q to
    # satisfy q < Lq and Lq <= D_out*PLANE; guard against future geometry changes.
    assert q_max < Lq <= D_out * PLANE

    n_taps = KD * KH * KW
    n_real = n_taps * C_pad
    Kc = _round_up(n_real, 128)         # contraction depth fed to the MXU (256 here)

    if batches_per_step is None:
        batches_per_step = _default_batches_per_step(N)
    NB = int(batches_per_step)
    assert N % NB == 0

    # ---- wrapper-side layout glue (cheap XLA ops at this size) ----
    x_pad = jnp.pad(
        x_ncdhw,
        ((0, 0), (0, C_pad - C_in),
         (padding, padding), (padding, padding), (padding, padding)))
    x_pl = x_pad.reshape(N, C_pad, Dp, Hp * Wp)
    x_pl = jnp.pad(x_pl, ((0, 0), (0, 0), (0, 0), (0, PLANE - Hp * Wp)))
    x_flat = x_pl.reshape(N, C_pad, Dp * PLANE)
    x_flat = jnp.pad(x_flat, ((0, 0), (0, 0), (0, Lp - Dp * PLANE)))

    # (C_out, C_in, KD, KH, KW) -> tap-major (C_out, n_taps*C_pad), zero-pad to Kc, f32.
    w2d = jnp.transpose(weight_oidhw, (0, 2, 3, 4, 1))          # (C_out, KD, KH, KW, C_in)
    w2d = jnp.pad(w2d, ((0, 0), (0, 0), (0, 0), (0, 0), (0, C_pad - C_in)))
    w2d = w2d.reshape(C_out, n_real)
    w2d = jnp.pad(w2d, ((0, 0), (0, Kc - n_real))).astype(x_ncdhw.dtype)

    hw_offsets = tuple(kh * Wp + kw for kh in range(KH) for kw in range(KW))

    kernel = functools.partial(
        _conv3d_im2col_kernel, C_pad=C_pad, Lq=Lq, PLANE=PLANE, KD=KD,
        n_hw=KH * KW, n_real=n_real, Kc=Kc, NB=NB, hw_offsets=hw_offsets)

    out_flat = pl.pallas_call(
        kernel,
        out_shape=jax.ShapeDtypeStruct((N, C_out, Lq), x_ncdhw.dtype),
        grid_spec=pltpu.PrefetchScalarGridSpec(
            num_scalar_prefetch=0,
            grid=(N // NB,),
            in_specs=[
                pl.BlockSpec((NB, C_pad, Lp), lambda n: (n, 0, 0)),
                pl.BlockSpec((C_out, Kc), lambda n: (0, 0)),
            ],
            out_specs=pl.BlockSpec((NB, C_out, Lq), lambda n: (n, 0, 0)),
            scratch_shapes=[pltpu.VMEM((Kc, NB * Lq), jnp.float32)],
        ),
        compiler_params=pltpu.CompilerParams(dimension_semantics=("parallel",)),
    )(x_flat, w2d)

    # Extract valid output columns q = d*PLANE + h*Wp + w and reshape to NCDHW.
    full = D_out * PLANE
    if Lq < full:
        out_flat = jnp.pad(out_flat, ((0, 0), (0, 0), (0, full - Lq)))
    out = out_flat[:, :, :full].reshape(N, C_out, D_out, PLANE)
    out = out[:, :, :, :H_out * Wp].reshape(N, C_out, D_out, H_out, Wp)
    return out[:, :, :, :, :W_out]


if __name__ == "__main__":
    # Module config: LayerTest(inp=4, out=8) -> Conv3d(4, 8, k=3, p=1, s=1, bias=False)
    N, C_in, C_out = 2, 4, 8
    D = H = W = 8
    K = 3

    key = jax.random.PRNGKey(0)
    kx, kw = jax.random.split(key)
    x = jax.random.normal(kx, (N, C_in, D, H, W), dtype=jnp.float32)
    # Deterministic kaiming-uniform-like weight init.
    fan_in = C_in * K * K * K
    bound = 1.0 / (fan_in ** 0.5)
    weight = jax.random.uniform(
        kw, (C_out, C_in, K, K, K), dtype=jnp.float32, minval=-bound, maxval=bound)

    out = jax.block_until_ready(conv3d_pallas(x, weight, padding=1))

    # Reference: XLA conv with PyTorch's NCDHW / OIDHW conventions (f32).
    ref = jax.lax.conv_general_dilated(
        x, weight,
        window_strides=(1, 1, 1),
        padding=((1, 1), (1, 1), (1, 1)),
        dimension_numbers=("NCDHW", "OIDHW", "NCDHW"))
    ref = jax.block_until_ready(ref)

    assert out.shape == (N, C_out, D, H, W), out.shape
    max_err = float(jnp.max(jnp.abs(out - ref)))
    # f32 operands; MXU default precision still rounds multiplicands, so keep a
    # conservative tolerance (typically observed error is far smaller).
    assert max_err < 3e-2, max_err
    print("KERNEL_OK")
</pallas_src>

<mosaic_0001>
module attributes {stable_mosaic.version = 11 : i64} {
  func.func @_conv3d_im2col_kernel(%arg0: i32, %arg1: memref<1x8x1408xf32, #tpu.memory_space<vmem>>, %arg2: memref<8x256xf32, #tpu.memory_space<vmem>>, %arg3: memref<1x8x1024xf32, #tpu.memory_space<vmem>>, %arg4: memref<256x1024xf32, #tpu.memory_space<vmem>>) attributes {dimension_semantics = [#tpu.dimension_semantics<parallel>], iteration_bounds = array<i64: 2>, scalar_prefetch = 0 : i64, scratch_operands = 1 : i64, tpu.core_type = #tpu.core_type<tc>, window_params = [{transform_indices = @transform_0, window_bounds = array<i64: 1, 8, 1408>}, {pipeline_mode = #tpu.pipeline_mode<synchronous>, transform_indices = @transform_1, window_bounds = array<i64: 8, 256>}, {transform_indices = @transform_2, window_bounds = array<i64: 1, 8, 1024>}]} {
    %cst = arith.constant 0.000000e+00 : f32
    %0 = vector.broadcast %cst : f32 to vector<40x1024xf32>
    %c216 = arith.constant 216 : index
    %c0 = arith.constant 0 : index
    %1 = vector.load %arg4[%c216, %c0] : memref<256x1024xf32, #tpu.memory_space<vmem>>, vector<40x1024xf32>
    tpu.vector_store %arg4[%c216, %c0], %0 {strides = array<i32>} : memref<256x1024xf32, #tpu.memory_space<vmem>>, vector<40x1024xf32>,
    %c0_0 = arith.constant 0 : index
    %c0_1 = arith.constant 0 : index
    %c0_2 = arith.constant 0 : index
    %2 = vector.load %arg1[%c0_0, %c0_1, %c0_2] : memref<1x8x1408xf32, #tpu.memory_space<vmem>>, vector<1x8x1408xf32>
    %3 = vector.shape_cast %2 : vector<1x8x1408xf32> to vector<8x1408xf32>
    %4 = vector.extract_strided_slice %3 {offsets = [0, 0], sizes = [8, 1280], strides = [1, 1]} : vector<8x1408xf32> to vector<8x1280xf32>
    %5 = vector.extract_strided_slice %4 {offsets = [0, 0], sizes = [8, 1024], strides = [1, 1]} : vector<8x1280xf32> to vector<8x1024xf32>
    %c0_3 = arith.constant 0 : index
    %c0_4 = arith.constant 0 : index
    %6 = vector.load %arg4[%c0_3, %c0_4] : memref<256x1024xf32, #tpu.memory_space<vmem>>, vector<8x1024xf32>
    tpu.vector_store %arg4[%c0_3, %c0_4], %5 {strides = array<i32>} : memref<256x1024xf32, #tpu.memory_space<vmem>>, vector<8x1024xf32>,
    %7 = vector.extract_strided_slice %4 {offsets = [0, 128], sizes = [8, 1024], strides = [1, 1]} : vector<8x1280xf32> to vector<8x1024xf32>
    %c72 = arith.constant 72 : index
    %c0_5 = arith.constant 0 : index
    %8 = vector.load %arg4[%c72, %c0_5] : memref<256x1024xf32, #tpu.memory_space<vmem>>, vector<8x1024xf32>
    tpu.vector_store %arg4[%c72, %c0_5], %7 {strides = array<i32>} : memref<256x1024xf32, #tpu.memory_space<vmem>>, vector<8x1024xf32>,
    %9 = vector.extract_strided_slice %4 {offsets = [0, 256], sizes = [8, 1024], strides = [1, 1]} : vector<8x1280xf32> to vector<8x1024xf32>
    %c144 = arith.constant 144 : index
    %c0_6 = arith.constant 0 : index
    %10 = vector.load %arg4[%c144, %c0_6] : memref<256x1024xf32, #tpu.memory_space<vmem>>, vector<8x1024xf32>
    tpu.vector_store %arg4[%c144, %c0_6], %9 {strides = array<i32>} : memref<256x1024xf32, #tpu.memory_space<vmem>>, vector<8x1024xf32>,
    %11 = vector.extract_strided_slice %3 {offsets = [0, 1], sizes = [8, 1280], strides = [1, 1]} : vector<8x1408xf32> to vector<8x1280xf32>
    %12 = vector.extract_strided_slice %11 {offsets = [0, 0], sizes = [8, 1024], strides = [1, 1]} : vector<8x1280xf32> to vector<8x1024xf32>
    %c8 = arith.constant 8 : index
    %c0_7 = arith.constant 0 : index
    %13 = vector.load %arg4[%c8, %c0_7] : memref<256x1024xf32, #tpu.memory_space<vmem>>, vector<8x1024xf32>
    tpu.vector_store %arg4[%c8, %c0_7], %12 {strides = array<i32>} : memref<256x1024xf32, #tpu.memory_space<vmem>>, vector<8x1024xf32>,
    %14 = vector.extract_strided_slice %11 {offsets = [0, 128], sizes = [8, 1024], strides = [1, 1]} : vector<8x1280xf32> to vector<8x1024xf32>
    %c80 = arith.constant 80 : index
    %c0_8 = arith.constant 0 : index
    %15 = vector.load %arg4[%c80, %c0_8] : memref<256x1024xf32, #tpu.memory_space<vmem>>, vector<8x1024xf32>
    tpu.vector_store %arg4[%c80, %c0_8], %14 {strides = array<i32>} : memref<256x1024xf32, #tpu.memory_space<vmem>>, vector<8x1024xf32>,
    %16 = vector.extract_strided_slice %11 {offsets = [0, 256], sizes = [8, 1024], strides = [1, 1]} : vector<8x1280xf32> to vector<8x1024xf32>
    %c152 = arith.constant 152 : index
    %c0_9 = arith.constant 0 : index
    %17 = vector.load %arg4[%c152, %c0_9] : memref<256x1024xf32, #tpu.memory_space<vmem>>, vector<8x1024xf32>
    tpu.vector_store %arg4[%c152, %c0_9], %16 {strides = array<i32>} : memref<256x1024xf32, #tpu.memory_space<vmem>>, vector<8x1024xf32>,
    %18 = vector.extract_strided_slice %3 {offsets = [0, 2], sizes = [8, 1280], strides = [1, 1]} : vector<8x1408xf32> to vector<8x1280xf32>
    %19 = vector.extract_strided_slice %18 {offsets = [0, 0], sizes = [8, 1024], strides = [1, 1]} : vector<8x1280xf32> to vector<8x1024xf32>
    %c16 = arith.constant 16 : index
    %c0_10 = arith.constant 0 : index
    %20 = vector.load %arg4[%c16, %c0_10] : memref<256x1024xf32, #tpu.memory_space<vmem>>, vector<8x1024xf32>
    tpu.vector_store %arg4[%c16, %c0_10], %19 {strides = array<i32>} : memref<256x1024xf32, #tpu.memory_space<vmem>>, vector<8x1024xf32>,
    %21 = vector.extract_strided_slice %18 {offsets = [0, 128], sizes = [8, 1024], strides = [1, 1]} : vector<8x1280xf32> to vector<8x1024xf32>
    %c88 = arith.constant 88 : index
    %c0_11 = arith.constant 0 : index
    %22 = vector.load %arg4[%c88, %c0_11] : memref<256x1024xf32, #tpu.memory_space<vmem>>, vector<8x1024xf32>
    tpu.vector_store %arg4[%c88, %c0_11], %21 {strides = array<i32>} : memref<256x1024xf32, #tpu.memory_space<vmem>>, vector<8x1024xf32>,
    %23 = vector.extract_strided_slice %18 {offsets = [0, 256], sizes = [8, 1024], strides = [1, 1]} : vector<8x1280xf32> to vector<8x1024xf32>
    %c160 = arith.constant 160 : index
    %c0_12 = arith.constant 0 : index
    %24 = vector.load %arg4[%c160, %c0_12] : memref<256x1024xf32, #tpu.memory_space<vmem>>, vector<8x1024xf32>
    tpu.vector_store %arg4[%c160, %c0_12], %23 {strides = array<i32>} : memref<256x1024xf32, #tpu.memory_space<vmem>>, vector<8x1024xf32>,
    %25 = vector.extract_strided_slice %3 {offsets = [0, 10], sizes = [8, 1280], strides = [1, 1]} : vector<8x1408xf32> to vector<8x1280xf32>
    %26 = vector.extract_strided_slice %25 {offsets = [0, 0], sizes = [8, 1024], strides = [1, 1]} : vector<8x1280xf32> to vector<8x1024xf32>
    %c24 = arith.constant 24 : index
    %c0_13 = arith.constant 0 : index
    %27 = vector.load %arg4[%c24, %c0_13] : memref<256x1024xf32, #tpu.memory_space<vmem>>, vector<8x1024xf32>
    tpu.vector_store %arg4[%c24, %c0_13], %26 {strides = array<i32>} : memref<256x1024xf32, #tpu.memory_space<vmem>>, vector<8x1024xf32>,
    %28 = vector.extract_strided_slice %25 {offsets = [0, 128], sizes = [8, 1024], strides = [1, 1]} : vector<8x1280xf32> to vector<8x1024xf32>
    %c96 = arith.constant 96 : index
    %c0_14 = arith.constant 0 : index
    %29 = vector.load %arg4[%c96, %c0_14] : memref<256x1024xf32, #tpu.memory_space<vmem>>, vector<8x1024xf32>
    tpu.vector_store %arg4[%c96, %c0_14], %28 {strides = array<i32>} : memref<256x1024xf32, #tpu.memory_space<vmem>>, vector<8x1024xf32>,
    %30 = vector.extract_strided_slice %25 {offsets = [0, 256], sizes = [8, 1024], strides = [1, 1]} : vector<8x1280xf32> to vector<8x1024xf32>
    %c168 = arith.constant 168 : index
    %c0_15 = arith.constant 0 : index
    %31 = vector.load %arg4[%c168, %c0_15] : memref<256x1024xf32, #tpu.memory_space<vmem>>, vector<8x1024xf32>
    tpu.vector_store %arg4[%c168, %c0_15], %30 {strides = array<i32>} : memref<256x1024xf32, #tpu.memory_space<vmem>>, vector<8x1024xf32>,
    %32 = vector.extract_strided_slice %3 {offsets = [0, 11], sizes = [8, 1280], strides = [1, 1]} : vector<8x1408xf32> to vector<8x1280xf32>
    %33 = vector.extract_strided_slice %32 {offsets = [0, 0], sizes = [8, 1024], strides = [1, 1]} : vector<8x1280xf32> to vector<8x1024xf32>
    %c32 = arith.constant 32 : index
    %c0_16 = arith.constant 0 : index
    %34 = vector.load %arg4[%c32, %c0_16] : memref<256x1024xf32, #tpu.memory_space<vmem>>, vector<8x1024xf32>
    tpu.vector_store %arg4[%c32, %c0_16], %33 {strides = array<i32>} : memref<256x1024xf32, #tpu.memory_space<vmem>>, vector<8x1024xf32>,
    %35 = vector.extract_strided_slice %32 {offsets = [0, 128], sizes = [8, 1024], strides = [1, 1]} : vector<8x1280xf32> to vector<8x1024xf32>
    %c104 = arith.constant 104 : index
    %c0_17 = arith.constant 0 : index
    %36 = vector.load %arg4[%c104, %c0_17] : memref<256x1024xf32, #tpu.memory_space<vmem>>, vector<8x1024xf32>
    tpu.vector_store %arg4[%c104, %c0_17], %35 {strides = array<i32>} : memref<256x1024xf32, #tpu.memory_space<vmem>>, vector<8x1024xf32>,
    %37 = vector.extract_strided_slice %32 {offsets = [0, 256], sizes = [8, 1024], strides = [1, 1]} : vector<8x1280xf32> to vector<8x1024xf32>
    %c176 = arith.constant 176 : index
    %c0_18 = arith.constant 0 : index
    %38 = vector.load %arg4[%c176, %c0_18] : memref<256x1024xf32, #tpu.memory_space<vmem>>, vector<8x1024xf32>
    tpu.vector_store %arg4[%c176, %c0_18], %37 {strides = array<i32>} : memref<256x1024xf32, #tpu.memory_space<vmem>>, vector<8x1024xf32>,
    %39 = vector.extract_strided_slice %3 {offsets = [0, 12], sizes = [8, 1280], strides = [1, 1]} : vector<8x1408xf32> to vector<8x1280xf32>
    %40 = vector.extract_strided_slice %39 {offsets = [0, 0], sizes = [8, 1024], strides = [1, 1]} : vector<8x1280xf32> to vector<8x1024xf32>
    %c40 = arith.constant 40 : index
    %c0_19 = arith.constant 0 : index
    %41 = vector.load %arg4[%c40, %c0_19] : memref<256x1024xf32, #tpu.memory_space<vmem>>, vector<8x1024xf32>
    tpu.vector_store %arg4[%c40, %c0_19], %40 {strides = array<i32>} : memref<256x1024xf32, #tpu.memory_space<vmem>>, vector<8x1024xf32>,
    %42 = vector.extract_strided_slice %39 {offsets = [0, 128], sizes = [8, 1024], strides = [1, 1]} : vector<8x1280xf32> to vector<8x1024xf32>
    %c112 = arith.constant 112 : index
    %c0_20 = arith.constant 0 : index
    %43 = vector.load %arg4[%c112, %c0_20] : memref<256x1024xf32, #tpu.memory_space<vmem>>, vector<8x1024xf32>
    tpu.vector_store %arg4[%c112, %c0_20], %42 {strides = array<i32>} : memref<256x1024xf32, #tpu.memory_space<vmem>>, vector<8x1024xf32>,
    %44 = vector.extract_strided_slice %39 {offsets = [0, 256], sizes = [8, 1024], strides = [1, 1]} : vector<8x1280xf32> to vector<8x1024xf32>
    %c184 = arith.constant 184 : index
    %c0_21 = arith.constant 0 : index
    %45 = vector.load %arg4[%c184, %c0_21] : memref<256x1024xf32, #tpu.memory_space<vmem>>, vector<8x1024xf32>
    tpu.vector_store %arg4[%c184, %c0_21], %44 {strides = array<i32>} : memref<256x1024xf32, #tpu.memory_space<vmem>>, vector<8x1024xf32>,
    %46 = vector.extract_strided_slice %3 {offsets = [0, 20], sizes = [8, 1280], strides = [1, 1]} : vector<8x1408xf32> to vector<8x1280xf32>
    %47 = vector.extract_strided_slice %46 {offsets = [0, 0], sizes = [8, 1024], strides = [1, 1]} : vector<8x1280xf32> to vector<8x1024xf32>
    %c48 = arith.constant 48 : index
    %c0_22 = arith.constant 0 : index
    %48 = vector.load %arg4[%c48, %c0_22] : memref<256x1024xf32, #tpu.memory_space<vmem>>, vector<8x1024xf32>
    tpu.vector_store %arg4[%c48, %c0_22], %47 {strides = array<i32>} : memref<256x1024xf32, #tpu.memory_space<vmem>>, vector<8x1024xf32>,
    %49 = vector.extract_strided_slice %46 {offsets = [0, 128], sizes = [8, 1024], strides = [1, 1]} : vector<8x1280xf32> to vector<8x1024xf32>
    %c120 = arith.constant 120 : index
    %c0_23 = arith.constant 0 : index
    %50 = vector.load %arg4[%c120, %c0_23] : memref<256x1024xf32, #tpu.memory_space<vmem>>, vector<8x1024xf32>
    tpu.vector_store %arg4[%c120, %c0_23], %49 {strides = array<i32>} : memref<256x1024xf32, #tpu.memory_space<vmem>>, vector<8x1024xf32>,
    %51 = vector.extract_strided_slice %46 {offsets = [0, 256], sizes = [8, 1024], strides = [1, 1]} : vector<8x1280xf32> to vector<8x1024xf32>
    %c192 = arith.constant 192 : index
    %c0_24 = arith.constant 0 : index
    %52 = vector.load %arg4[%c192, %c0_24] : memref<256x1024xf32, #tpu.memory_space<vmem>>, vector<8x1024xf32>
    tpu.vector_store %arg4[%c192, %c0_24], %51 {strides = array<i32>} : memref<256x1024xf32, #tpu.memory_space<vmem>>, vector<8x1024xf32>,
    %53 = vector.extract_strided_slice %3 {offsets = [0, 21], sizes = [8, 1280], strides = [1, 1]} : vector<8x1408xf32> to vector<8x1280xf32>
    %54 = vector.extract_strided_slice %53 {offsets = [0, 0], sizes = [8, 1024], strides = [1, 1]} : vector<8x1280xf32> to vector<8x1024xf32>
    %c56 = arith.constant 56 : index
    %c0_25 = arith.constant 0 : index
    %55 = vector.load %arg4[%c56, %c0_25] : memref<256x1024xf32, #tpu.memory_space<vmem>>, vector<8x1024xf32>
    tpu.vector_store %arg4[%c56, %c0_25], %54 {strides = array<i32>} : memref<256x1024xf32, #tpu.memory_space<vmem>>, vector<8x1024xf32>,
    %56 = vector.extract_strided_slice %53 {offsets = [0, 128], sizes = [8, 1024], strides = [1, 1]} : vector<8x1280xf32> to vector<8x1024xf32>
    %c128 = arith.constant 128 : index
    %c0_26 = arith.constant 0 : index
    %57 = vector.load %arg4[%c128, %c0_26] : memref<256x1024xf32, #tpu.memory_space<vmem>>, vector<8x1024xf32>
    tpu.vector_store %arg4[%c128, %c0_26], %56 {strides = array<i32>} : memref<256x1024xf32, #tpu.memory_space<vmem>>, vector<8x1024xf32>,
    %58 = vector.extract_strided_slice %53 {offsets = [0, 256], sizes = [8, 1024], strides = [1, 1]} : vector<8x1280xf32> to vector<8x1024xf32>
    %c200 = arith.constant 200 : index
    %c0_27 = arith.constant 0 : index
    %59 = vector.load %arg4[%c200, %c0_27] : memref<256x1024xf32, #tpu.memory_space<vmem>>, vector<8x1024xf32>
    tpu.vector_store %arg4[%c200, %c0_27], %58 {strides = array<i32>} : memref<256x1024xf32, #tpu.memory_space<vmem>>, vector<8x1024xf32>,
    %60 = vector.extract_strided_slice %3 {offsets = [0, 22], sizes = [8, 1280], strides = [1, 1]} : vector<8x1408xf32> to vector<8x1280xf32>
    %61 = vector.extract_strided_slice %60 {offsets = [0, 0], sizes = [8, 1024], strides = [1, 1]} : vector<8x1280xf32> to vector<8x1024xf32>
    %c64 = arith.constant 64 : index
    %c0_28 = arith.constant 0 : index
    %62 = vector.load %arg4[%c64, %c0_28] : memref<256x1024xf32, #tpu.memory_space<vmem>>, vector<8x1024xf32>
    tpu.vector_store %arg4[%c64, %c0_28], %61 {strides = array<i32>} : memref<256x1024xf32, #tpu.memory_space<vmem>>, vector<8x1024xf32>,
    %63 = vector.extract_strided_slice %60 {offsets = [0, 128], sizes = [8, 1024], strides = [1, 1]} : vector<8x1280xf32> to vector<8x1024xf32>
    %c136 = arith.constant 136 : index
    %c0_29 = arith.constant 0 : index
    %64 = vector.load %arg4[%c136, %c0_29] : memref<256x1024xf32, #tpu.memory_space<vmem>>, vector<8x1024xf32>
    tpu.vector_store %arg4[%c136, %c0_29], %63 {strides = array<i32>} : memref<256x1024xf32, #tpu.memory_space<vmem>>, vector<8x1024xf32>,
    %65 = vector.extract_strided_slice %60 {offsets = [0, 256], sizes = [8, 1024], strides = [1, 1]} : vector<8x1280xf32> to vector<8x1024xf32>
    %c208 = arith.constant 208 : index
    %c0_30 = arith.constant 0 : index
    %66 = vector.load %arg4[%c208, %c0_30] : memref<256x1024xf32, #tpu.memory_space<vmem>>, vector<8x1024xf32>
    tpu.vector_store %arg4[%c208, %c0_30], %65 {strides = array<i32>} : memref<256x1024xf32, #tpu.memory_space<vmem>>, vector<8x1024xf32>,
    %c0_31 = arith.constant 0 : index
    %c0_32 = arith.constant 0 : index
    %67 = vector.load %arg2[%c0_31, %c0_32] : memref<8x256xf32, #tpu.memory_space<vmem>>, vector<8x256xf32>
    %c0_33 = arith.constant 0 : index
    %c0_34 = arith.constant 0 : index
    %68 = vector.load %arg4[%c0_33, %c0_34] : memref<256x1024xf32, #tpu.memory_space<vmem>>, vector<256x1024xf32>
    %cst_35 = arith.constant dense<0.000000e+00> : vector<8x1024xf32>
    %69 = tpu.matmul %67, %68, %cst_35 {dimension_numbers = #tpu.dot_dimension_numbers<[1], [0], [0], [1], [0, 0, 1, 1], [], []>} : vector<8x256xf32>, vector<256x1024xf32>, vector<8x1024xf32> -> vector<8x1024xf32>
    %c0_36 = arith.constant 0 : index
    %c0_37 = arith.constant 0 : index
    %c0_38 = arith.constant 0 : index
    %70 = vector.load %arg3[%c0_36, %c0_37, %c0_38] : memref<1x8x1024xf32, #tpu.memory_space<vmem>>, vector<1x8x1024xf32>
    %71 = vector.shape_cast %70 : vector<1x8x1024xf32> to vector<8x1024xf32>
    %72 = vector.shape_cast %69 : vector<8x1024xf32> to vector<1x8x1024xf32>
    tpu.vector_store %arg3[%c0_36, %c0_37, %c0_38], %72 {strides = array<i32>} : memref<1x8x1024xf32, #tpu.memory_space<vmem>>, vector<1x8x1024xf32>,
    return
  }
  func.func @transform_0(%arg0: i32) -> (i32, i32, i32) {
    %c0_i32 = arith.constant 0 : i32
    %c0_i32_0 = arith.constant 0 : i32
    %c0_i32_1 = arith.constant 0 : i32
    return %arg0, %c0_i32, %c0_i32_0 : i32, i32, i32
  }
  func.func @transform_1(%arg0: i32) -> (i32, i32) {
    %c0_i32 = arith.constant 0 : i32
    %c0_i32_0 = arith.constant 0 : i32
    %c0_i32_1 = arith.constant 0 : i32
    return %c0_i32, %c0_i32_0 : i32, i32
  }
  func.func @transform_2(%arg0: i32) -> (i32, i32, i32) {
    %c0_i32 = arith.constant 0 : i32
    %c0_i32_0 = arith.constant 0 : i32
    %c0_i32_1 = arith.constant 0 : i32
    return %arg0, %c0_i32, %c0_i32_0 : i32, i32, i32
  }
}

</mosaic_0001>

<llo_original>
// kernel: tpu_custom_call.1
$region0: #{tpu_custom_call.1}
  #allocation0 [shape = 'u32[]', space=smem, size = 0x4, offset = 0x4, fixed_abs, tag = 'smem constant byte address 0x4 - core index']
  #allocation1 [shape = 'u32[144,128]{1,0:T(1,128)}', space=vmem, size = 0x12000, scoped, tag = 'internal scratch']
  #allocation2 [shape = 'f32[256,1024]{1,0:T(8,128)}', space=vmem, size = 0x100000, scoped, tag = 'scratch operand']
  %s0 = inlined_call_operand.hbm [shape: f32[2,8,1408], index: 0, kind: input, shape index: {}]
  %s1 = inlined_call_operand.hbm [shape: f32[8,256], index: 1, kind: input, shape index: {}]
  %s2 = inlined_call_operand.hbm [shape: f32[2,8,1024], index: 2, kind: output, shape index: {}]
  %s3 = sld [smem:[#allocation0]]
  $region49: #{tpu_custom_call.1} parent=0
    _
  %s5 = ssub.s32 1, %s3
  %s6 = scalar_select 0, %s5, %s3
  $region1: #{tpu_custom_call.1} parent=0
    #allocation3 [shape = 'u8[90112]{0}', space=vmem, size = 0x16000, scoped, tag = 'input window, operand 0']
    #allocation4 [shape = 's32[2]{0}', space=sflag, size = 0x8, scoped, tag = 'scoped memory for tpu_custom_call.1']
    #allocation5 [shape = 's32[2]{0}', space=sflag, size = 0x8, scoped, tag = 'scoped memory for tpu_custom_call.1']
    #allocation6 [shape = 'u8[8192]{0}', space=vmem, size = 0x2000, scoped, tag = 'input window, operand 1, single buffered']
    #allocation7 [shape = 's32[1]{0}', space=sflag, size = 0x4, scoped, tag = 'scoped memory for tpu_custom_call.1']
    #allocation8 [shape = 'u8[65536]{0}', space=vmem, size = 0x10000, scoped, tag = 'output window, operand 0']
    %7 = vsyncpa [#allocation4], 0
    %s8 = scalar_lea.sflag [#allocation4], 1
    %9 = vsyncpa %s8, 0
    %10 = vsyncpa [#allocation7], 0
    %11 = vsyncpa [#allocation5], 0
    %s12 = scalar_lea.sflag [#allocation5], 1
    %13 = vsyncpa %s12, 0
    loop: start=0, step=1, limit=4
    $region2: #{tpu_custom_call.1} parent=1 // loop_pre_header
      _
    $region3: #{tpu_custom_call.1} parent=1 // loop_header
      %s15 = sphi 0, %s19
      %p16 = scmp.ge.s32.totalorder %s15, 4
      %s25 = sphi 0, %s27
      %s28 = sphi 0, %s25
      %s29 = sphi 0, %s28
      %s45 = sphi 0, %s29
      %s49 = sphi 0, %s49
      %s51 = sphi 0, %s49
      %s52 = sphi 0, %s51
      %s66 = sphi 0, %s52
      %s72 = sphi 0, %s74
      %s75 = sphi 0, %s72
      %s76 = sphi 0, %s75
      %s92 = sphi 0, %s76
    $region4: #{tpu_custom_call.1} parent=1 // loop_header_branch
      %18 = sbr.rel (%p16) target = $region8
    $region5: #{tpu_custom_call.1} parent=1 // loop_body
      %s20 = ssub.s32 %s15, 1
      %s21 = ssub.s32 %s15, 2
      %s22 = sadd.s32 %s15, 1
      %s23 = ssub.s32 %s15, %s22
      %p24 = scmp.eq.s32.totalorder %s23, 0
      %s26 = sadd.s32 %s25, 1
      %s27 = scalar_select %p24, %s25, %s26
      %p30 = pneg %p24
      %p31 = scmp.eq.s32.totalorder %s15, 1
      %p32 = por %p30, %p31
      %p33 = scmp.ne.s32.totalorder %s25, %s28
      %p34 = scmp.eq.s32.totalorder %s15, 0
      %p35 = por %p33, %p34
      %p36 = scmp.ne.s32.totalorder %s25, %s28
      %p37 = scmp.eq.s32.totalorder %s20, 1
      %p38 = por %p36, %p37
      %p39 = scmp.ne.s32.totalorder %s28, %s29
      %p40 = scmp.eq.s32.totalorder %s20, 0
      %p41 = por %p39, %p40
      %p42 = scmp.ne.s32.totalorder %s28, %s29
      %p43 = scmp.eq.s32.totalorder %s21, 1
      %p44 = por %p42, %p43
      %p46 = scmp.ne.s32.totalorder %s29, %s45
      %p47 = scmp.eq.s32.totalorder %s21, 0
      %p48 = por %p46, %p47
      %s50 = sadd.s32 %s49, 1
      %p53 = scmp.eq.s32.totalorder %s15, 1
      %p54 = scmp.ne.s32.totalorder %s49, %s51
      %p55 = scmp.eq.s32.totalorder %s15, 0
      %p56 = por %p54, %p55
      %p57 = scmp.ne.s32.totalorder %s49, %s51
      %p58 = scmp.eq.s32.totalorder %s20, 1
      %p59 = por %p57, %p58
      %p60 = scmp.ne.s32.totalorder %s51, %s52
      %p61 = scmp.eq.s32.totalorder %s20, 0
      %p62 = por %p60, %p61
      %p63 = scmp.ne.s32.totalorder %s51, %s52
      %p64 = scmp.eq.s32.totalorder %s21, 1
      %p65 = por %p63, %p64
      %p67 = scmp.ne.s32.totalorder %s52, %s66
      %p68 = scmp.eq.s32.totalorder %s21, 0
      %p69 = por %p67, %p68
      %s70 = ssub.s32 %s15, %s22
      %p71 = scmp.eq.s32.totalorder %s70, 0
      %s73 = sadd.s32 %s72, 1
      %s74 = scalar_select %p71, %s72, %s73
      %p77 = pneg %p71
      %p78 = scmp.eq.s32.totalorder %s15, 1
      %p79 = por %p77, %p78
      %p80 = scmp.ne.s32.totalorder %s72, %s75
      %p81 = scmp.eq.s32.totalorder %s15, 0
      %p82 = por %p80, %p81
      %p83 = scmp.ne.s32.totalorder %s72, %s75
      %p84 = scmp.eq.s32.totalorder %s20, 1
      %p85 = por %p83, %p84
      %p86 = scmp.ne.s32.totalorder %s75, %s76
      %p87 = scmp.eq.s32.totalorder %s20, 0
      %p88 = por %p86, %p87
      %p89 = scmp.ne.s32.totalorder %s75, %s76
      %p90 = scmp.eq.s32.totalorder %s21, 1
      %p91 = por %p89, %p90
      %p93 = scmp.ne.s32.totalorder %s76, %s92
      %p94 = scmp.eq.s32.totalorder %s21, 0
      %p95 = por %p93, %p94
      %p96 = scmp.le.s32.totalorder 1, %s15
      %p97 = scmp.lt.s32.totalorder %s15, 3
      %p98 = pnand %p96, %p97
      %p99 = pneg %p98
      // Predicated region
      $region9: #{tpu_custom_call.1} parent=5 // pred_check
        _
      $region10: #{tpu_custom_call.1} parent=5 // pred_check_branch
        %101 = sbr.rel (%p98) target = $region12
      $region11: #{tpu_custom_call.1} parent=5 // pred_region
        %s102 = ssub.s32 %s15, 1
        // Predicated region
        $region13: #{tpu_custom_call.1} parent=11 // pred_check
          %p103 = pneg %p62
        $region14: #{tpu_custom_call.1} parent=11 // pred_check_branch
          %105 = sbr.rel (%p103) target = $region16
        $region15: #{tpu_custom_call.1} parent=11 // pred_region
          %s107 = ssub.s32 256, 256
          %108 = vsyncadd [#allocation7], %s107
          %s110 = sshll.u32 [#allocation6], 4
          %s111 = int_to_ptr.vmem [resolvable:$true] %s110
          %113 = dma.hbm_to_vmem [thread:$0]  %s1, 256, %s111, [#allocation7]
        $region16: #{tpu_custom_call.1} parent=11 // pred_fallthru
          _
      $region12: #{tpu_custom_call.1} parent=5 // pred_fallthru
        _
      %p114 = scmp.lt.s32.totalorder %s15, 2
      // Predicated region
      $region17: #{tpu_custom_call.1} parent=5 // pred_check
        %p115 = pneg %p114
      $region18: #{tpu_custom_call.1} parent=5 // pred_check_branch
        %117 = sbr.rel (%p115) target = $region20
      $region19: #{tpu_custom_call.1} parent=5 // pred_region
        // Predicated region
        $region21: #{tpu_custom_call.1} parent=19 // pred_check
          %p118 = pneg %p35
        $region22: #{tpu_custom_call.1} parent=19 // pred_check_branch
          %120 = sbr.rel (%p118) target = $region24
        $region23: #{tpu_custom_call.1} parent=19 // pred_region
          %s121 = sand.u32 %s25, 1
          %s122 = scalar_lea.sflag [#allocation4], %s121
          %s123 = sand.u32 %s25, 1
          %s124 = smul.addr %s123, 88
          %s125 = scalar_lea.vmem [#allocation3], %s124
          %s127 = ssub.s32 1408, 1408
          %128 = vsyncadd %s122, %s127
          %s129 = smul.addr %s15, 11
          %s130 = smul.addr %s129, 128
          %s131 = scalar_lea.hbm %s0, %s130
          %s133 = sshll.u32 %s125, 4
          %s134 = int_to_ptr.vmem [resolvable:$true] %s133
          %136 = dma.hbm_to_vmem [thread:$0]  %s131, 1408, %s134, %s122
        $region24: #{tpu_custom_call.1} parent=19 // pred_fallthru
          _
      $region20: #{tpu_custom_call.1} parent=5 // pred_fallthru
        _
      %p137 = scmp.le.s32.totalorder 1, %s15
      %p138 = scmp.lt.s32.totalorder %s15, 3
      %p139 = pnand %p137, %p138
      %p140 = pneg %p139
      // Predicated region
      $region25: #{tpu_custom_call.1} parent=5 // pred_check
        _
      $region26: #{tpu_custom_call.1} parent=5 // pred_check_branch
        %142 = sbr.rel (%p139) target = $region28
      $region27: #{tpu_custom_call.1} parent=5 // pred_region
        %s143 = ssub.s32 %s15, 1
        %s144 = sand.u32 %s28, 1
        %s145 = scalar_lea.sflag [#allocation4], %s144
        %s146 = sand.u32 %s28, 1
        %s147 = smul.addr %s146, 88
        %s148 = scalar_lea.vmem [#allocation3], %s147
        // Predicated region
        $region29: #{tpu_custom_call.1} parent=27 // pred_check
          %p149 = pneg %p41
        $region30: #{tpu_custom_call.1} parent=27 // pred_check_branch
          %151 = sbr.rel (%p149) target = $region32
        $region31: #{tpu_custom_call.1} parent=27 // pred_region
          %152 = dma.done %s145, 1408
        $region32: #{tpu_custom_call.1} parent=27 // pred_fallthru
          _
        // Predicated region
        $region33: #{tpu_custom_call.1} parent=27 // pred_check
          %p153 = pneg %p62
        $region34: #{tpu_custom_call.1} parent=27 // pred_check_branch
          %155 = sbr.rel (%p153) target = $region36
        $region35: #{tpu_custom_call.1} parent=27 // pred_region
          %156 = dma.done [#allocation7], 256
        $region36: #{tpu_custom_call.1} parent=27 // pred_fallthru
          _
        %s157 = sand.u32 %s28, 1
        %s158 = scalar_lea.sflag [#allocation4], %s157
        %s159 = sand.u32 %s28, 1
        %s160 = smul.addr %s159, 88
        %s161 = scalar_lea.vmem [#allocation3], %s160
        %p162 = pneg %p41
        %p163 = pneg %p38
        %p164 = pneg %p62
        %p165 = pneg %p59
        %p166 = pneg %p88
        %p167 = pneg %p85
        %s168 = sand.u32 %s75, 1
        %s169 = scalar_lea.sflag [#allocation5], %s168
        %s170 = sand.u32 %s75, 1
        %s171 = smul.addr %s170, 64
        %s172 = scalar_lea.vmem [#allocation8], %s171
        %173 = vst [vmem:[#allocation2 + $0x6c0] sm:$0xff] 0.0
        %174 = vst [vmem:[#allocation2 + $0x6c8] sm:$0xff] 0.0
        %175 = vst [vmem:[#allocation2 + $0x6d0] sm:$0xff] 0.0
        %176 = vst [vmem:[#allocation2 + $0x6d8] sm:$0xff] 0.0
        %177 = vst [vmem:[#allocation2 + $0x6e0] sm:$0xff] 0.0
        %178 = vst [vmem:[#allocation2 + $0x6e8] sm:$0xff] 0.0
        %179 = vst [vmem:[#allocation2 + $0x6f0] sm:$0xff] 0.0
        %180 = vst [vmem:[#allocation2 + $0x6f8] sm:$0xff] 0.0
        %181 = vst [vmem:[#allocation2 + $0x700] sm:$0xff] 0.0
        %182 = vst [vmem:[#allocation2 + $0x708] sm:$0xff] 0.0
        %183 = vst [vmem:[#allocation2 + $0x710] sm:$0xff] 0.0
        %184 = vst [vmem:[#allocation2 + $0x718] sm:$0xff] 0.0
        %185 = vst [vmem:[#allocation2 + $0x720] sm:$0xff] 0.0
        %186 = vst [vmem:[#allocation2 + $0x728] sm:$0xff] 0.0
        %187 = vst [vmem:[#allocation2 + $0x730] sm:$0xff] 0.0
        %188 = vst [vmem:[#allocation2 + $0x738] sm:$0xff] 0.0
        %189 = vst [vmem:[#allocation2 + $0x740] sm:$0xff] 0.0
        %190 = vst [vmem:[#allocation2 + $0x748] sm:$0xff] 0.0
        %191 = vst [vmem:[#allocation2 + $0x750] sm:$0xff] 0.0
        %192 = vst [vmem:[#allocation2 + $0x758] sm:$0xff] 0.0
        %193 = vst [vmem:[#allocation2 + $0x760] sm:$0xff] 0.0
        %194 = vst [vmem:[#allocation2 + $0x768] sm:$0xff] 0.0
        %195 = vst [vmem:[#allocation2 + $0x770] sm:$0xff] 0.0
        %196 = vst [vmem:[#allocation2 + $0x778] sm:$0xff] 0.0
        %197 = vst [vmem:[#allocation2 + $0x780] sm:$0xff] 0.0
        %198 = vst [vmem:[#allocation2 + $0x788] sm:$0xff] 0.0
        %199 = vst [vmem:[#allocation2 + $0x790] sm:$0xff] 0.0
        %200 = vst [vmem:[#allocation2 + $0x798] sm:$0xff] 0.0
        %201 = vst [vmem:[#allocation2 + $0x7a0] sm:$0xff] 0.0
        %202 = vst [vmem:[#allocation2 + $0x7a8] sm:$0xff] 0.0
        %203 = vst [vmem:[#allocation2 + $0x7b0] sm:$0xff] 0.0
        %204 = vst [vmem:[#allocation2 + $0x7b8] sm:$0xff] 0.0
        %205 = vst [vmem:[#allocation2 + $0x7c0] sm:$0xff] 0.0
        %206 = vst [vmem:[#allocation2 + $0x7c8] sm:$0xff] 0.0
        %207 = vst [vmem:[#allocation2 + $0x7d0] sm:$0xff] 0.0
        %208 = vst [vmem:[#allocation2 + $0x7d8] sm:$0xff] 0.0
        %209 = vst [vmem:[#allocation2 + $0x7e0] sm:$0xff] 0.0
        %210 = vst [vmem:[#allocation2 + $0x7e8] sm:$0xff] 0.0
        %211 = vst [vmem:[#allocation2 + $0x7f0] sm:$0xff] 0.0
        %212 = vst [vmem:[#allocation2 + $0x7f8] sm:$0xff] 0.0
        %v213 = vld [vmem:[%s148] sm:$0xff]
        %v214 = vld [vmem:[%s148 + $0x8] sm:$0xff]
        %v215 = vld [vmem:[%s148 + $0x10] sm:$0xff]
        %v216 = vld [vmem:[%s148 + $0x18] sm:$0xff]
        %v217 = vld [vmem:[%s148 + $0x20] sm:$0xff]
        %v218 = vld [vmem:[%s148 + $0x28] sm:$0xff]
        %v219 = vld [vmem:[%s148 + $0x30] sm:$0xff]
        %v220 = vld [vmem:[%s148 + $0x38] sm:$0xff]
        %v221 = vld [vmem:[%s148 + $0x40] sm:$0xff]
        %v222 = vld [vmem:[%s148 + $0x48] sm:$0xff]
        %v223 = vld [vmem:[%s148 + $0x50] sm:$0xff]
        %224 = vst [vmem:[#allocation2] sm:$0xff] %v213
        %225 = vst [vmem:[#allocation2 + $0x8] sm:$0xff] %v214
        %226 = vst [vmem:[#allocation2 + $0x10] sm:$0xff] %v215
        %227 = vst [vmem:[#allocation2 + $0x18] sm:$0xff] %v216
        %228 = vst [vmem:[#allocation2 + $0x20] sm:$0xff] %v217
        %229 = vst [vmem:[#allocation2 + $0x28] sm:$0xff] %v218
        %230 = vst [vmem:[#allocation2 + $0x30] sm:$0xff] %v219
        %231 = vst [vmem:[#allocation2 + $0x38] sm:$0xff] %v220
        %232 = vst [vmem:[#allocation2 + $0x240] sm:$0xff] %v214
        %233 = vst [vmem:[#allocation2 + $0x248] sm:$0xff] %v215
        %234 = vst [vmem:[#allocation2 + $0x250] sm:$0xff] %v216
        %235 = vst [vmem:[#allocation2 + $0x258] sm:$0xff] %v217
        %236 = vst [vmem:[#allocation2 + $0x260] sm:$0xff] %v218
        %237 = vst [vmem:[#allocation2 + $0x268] sm:$0xff] %v219
        %238 = vst [vmem:[#allocation2 + $0x270] sm:$0xff] %v220
        %239 = vst [vmem:[#allocation2 + $0x278] sm:$0xff] %v221
        %240 = vst [vmem:[#allocation2 + $0x480] sm:$0xff] %v215
        %241 = vst [vmem:[#allocation2 + $0x488] sm:$0xff] %v216
        %242 = vst [vmem:[#allocation2 + $0x490] sm:$0xff] %v217
        %243 = vst [vmem:[#allocation2 + $0x498] sm:$0xff] %v218
        %244 = vst [vmem:[#allocation2 + $0x4a0] sm:$0xff] %v219
        %245 = vst [vmem:[#allocation2 + $0x4a8] sm:$0xff] %v220
        %246 = vst [vmem:[#allocation2 + $0x4b0] sm:$0xff] %v221
        %247 = vst [vmem:[#allocation2 + $0x4b8] sm:$0xff] %v222
        %257 = vrot.lane.b32.xlu0 %v213, 127
        %v258 = vpop.permute.xlu0 %257
        %259 = vrot.lane.b32.xlu0 %v214, 127
        %v260 = vpop.permute.xlu0 %259
        %261 = vrot.lane.b32.xlu0 %v215, 127
        %v262 = vpop.permute.xlu0 %261
        %263 = vrot.lane.b32.xlu0 %v216, 127
        %v264 = vpop.permute.xlu0 %263
        %265 = vrot.lane.b32.xlu0 %v217, 127
        %v266 = vpop.permute.xlu0 %265
        %267 = vrot.lane.b32.xlu0 %v218, 127
        %v268 = vpop.permute.xlu0 %267
        %269 = vrot.lane.b32.xlu0 %v219, 127
        %v270 = vpop.permute.xlu0 %269
        %271 = vrot.lane.b32.xlu0 %v220, 127
        %v272 = vpop.permute.xlu0 %271
        %273 = vrot.lane.b32.xlu0 %v221, 127
        %v274 = vpop.permute.xlu0 %273
        %vm275 = vcmask 1039360
        %v276 = vsel %vm275, %v258, %v260
        %v277 = vsel %vm275, %v260, %v262
        %v278 = vsel %vm275, %v262, %v264
        %v279 = vsel %vm275, %v264, %v266
        %v280 = vsel %vm275, %v266, %v268
        %v281 = vsel %vm275, %v268, %v270
        %v282 = vsel %vm275, %v270, %v272
        %v283 = vsel %vm275, %v272, %v274
        %292 = vst [vmem:[#allocation2 + $0x40] sm:$0xff] %v276
        %293 = vst [vmem:[#allocation2 + $0x48] sm:$0xff] %v277
        %294 = vst [vmem:[#allocation2 + $0x50] sm:$0xff] %v278
        %295 = vst [vmem:[#allocation2 + $0x58] sm:$0xff] %v279
        %296 = vst [vmem:[#allocation2 + $0x60] sm:$0xff] %v280
        %297 = vst [vmem:[#allocation2 + $0x68] sm:$0xff] %v281
        %298 = vst [vmem:[#allocation2 + $0x70] sm:$0xff] %v282
        %299 = vst [vmem:[#allocation2 + $0x78] sm:$0xff] %v283
        %301 = vrot.lane.b32.xlu0 %v222, 127
        %v302 = vpop.permute.xlu0 %301
        %v303 = vsel %vm275, %v274, %v302
        %305 = vst [vmem:[#allocation2 + $0x280] sm:$0xff] %v277
        %306 = vst [vmem:[#allocation2 + $0x288] sm:$0xff] %v278
        %307 = vst [vmem:[#allocation2 + $0x290] sm:$0xff] %v279
        %308 = vst [vmem:[#allocation2 + $0x298] sm:$0xff] %v280
        %309 = vst [vmem:[#allocation2 + $0x2a0] sm:$0xff] %v281
        %310 = vst [vmem:[#allocation2 + $0x2a8] sm:$0xff] %v282
        %311 = vst [vmem:[#allocation2 + $0x2b0] sm:$0xff] %v283
        %312 = vst [vmem:[#allocation2 + $0x2b8] sm:$0xff] %v303
        %314 = vrot.lane.b32.xlu0 %v223, 127
        %v315 = vpop.permute.xlu0 %314
        %v316 = vsel %vm275, %v302, %v315
        %318 = vst [vmem:[#allocation2 + $0x4c0] sm:$0xff] %v278
        %319 = vst [vmem:[#allocation2 + $0x4c8] sm:$0xff] %v279
        %320 = vst [vmem:[#allocation2 + $0x4d0] sm:$0xff] %v280
        %321 = vst [vmem:[#allocation2 + $0x4d8] sm:$0xff] %v281
        %322 = vst [vmem:[#allocation2 + $0x4e0] sm:$0xff] %v282
        %323 = vst [vmem:[#allocation2 + $0x4e8] sm:$0xff] %v283
        %324 = vst [vmem:[#allocation2 + $0x4f0] sm:$0xff] %v303
        %325 = vst [vmem:[#allocation2 + $0x4f8] sm:$0xff] %v316
        %326 = vrot.lane.b32.xlu0 %v213, 126
        %v327 = vpop.permute.xlu0 %326
        %328 = vrot.lane.b32.xlu0 %v214, 126
        %v329 = vpop.permute.xlu0 %328
        %330 = vrot.lane.b32.xlu0 %v215, 126
        %v331 = vpop.permute.xlu0 %330
        %332 = vrot.lane.b32.xlu0 %v216, 126
        %v333 = vpop.permute.xlu0 %332
        %334 = vrot.lane.b32.xlu0 %v217, 126
        %v335 = vpop.permute.xlu0 %334
        %336 = vrot.lane.b32.xlu0 %v218, 126
        %v337 = vpop.permute.xlu0 %336
        %338 = vrot.lane.b32.xlu0 %v219, 126
        %v339 = vpop.permute.xlu0 %338
        %340 = vrot.lane.b32.xlu0 %v220, 126
        %v341 = vpop.permute.xlu0 %340
        %342 = vrot.lane.b32.xlu0 %v221, 126
        %v343 = vpop.permute.xlu0 %342
        %vm344 = vcmask 1031168
        %v345 = vsel %vm344, %v327, %v329
        %v346 = vsel %vm344, %v329, %v331
        %v347 = vsel %vm344, %v331, %v333
        %v348 = vsel %vm344, %v333, %v335
        %v349 = vsel %vm344, %v335, %v337
        %v350 = vsel %vm344, %v337, %v339
        %v351 = vsel %vm344, %v339, %v341
        %v352 = vsel %vm344, %v341, %v343
        %361 = vst [vmem:[#allocation2 + $0x80] sm:$0xff] %v345
        %362 = vst [vmem:[#allocation2 + $0x88] sm:$0xff] %v346
        %363 = vst [vmem:[#allocation2 + $0x90] sm:$0xff] %v347
        %364 = vst [vmem:[#allocation2 + $0x98] sm:$0xff] %v348
        %365 = vst [vmem:[#allocation2 + $0xa0] sm:$0xff] %v349
        %366 = vst [vmem:[#allocation2 + $0xa8] sm:$0xff] %v350
        %367 = vst [vmem:[#allocation2 + $0xb0] sm:$0xff] %v351
        %368 = vst [vmem:[#allocation2 + $0xb8] sm:$0xff] %v352
        %369 = vrot.lane.b32.xlu0 %v222, 126
        %v370 = vpop.permute.xlu0 %369
        %v371 = vsel %vm344, %v343, %v370
        %373 = vst [vmem:[#allocation2 + $0x2c0] sm:$0xff] %v346
        %374 = vst [vmem:[#allocation2 + $0x2c8] sm:$0xff] %v347
        %375 = vst [vmem:[#allocation2 + $0x2d0] sm:$0xff] %v348
        %376 = vst [vmem:[#allocation2 + $0x2d8] sm:$0xff] %v349
        %377 = vst [vmem:[#allocation2 + $0x2e0] sm:$0xff] %v350
        %378 = vst [vmem:[#allocation2 + $0x2e8] sm:$0xff] %v351
        %379 = vst [vmem:[#allocation2 + $0x2f0] sm:$0xff] %v352
        %380 = vst [vmem:[#allocation2 + $0x2f8] sm:$0xff] %v371
        %381 = vrot.lane.b32.xlu0 %v223, 126
        %v382 = vpop.permute.xlu0 %381
        %v383 = vsel %vm344, %v370, %v382
        %385 = vst [vmem:[#allocation2 + $0x500] sm:$0xff] %v347
        %386 = vst [vmem:[#allocation2 + $0x508] sm:$0xff] %v348
        %387 = vst [vmem:[#allocation2 + $0x510] sm:$0xff] %v349
        %388 = vst [vmem:[#allocation2 + $0x518] sm:$0xff] %v350
        %389 = vst [vmem:[#allocation2 + $0x520] sm:$0xff] %v351
        %390 = vst [vmem:[#allocation2 + $0x528] sm:$0xff] %v352
        %391 = vst [vmem:[#allocation2 + $0x530] sm:$0xff] %v371
        %392 = vst [vmem:[#allocation2 + $0x538] sm:$0xff] %v383
        %393 = vrot.lane.b32.xlu0 %v213, 118
        %v394 = vpop.permute.xlu0 %393
        %395 = vrot.lane.b32.xlu0 %v214, 118
        %v396 = vpop.permute.xlu0 %395
        %397 = vrot.lane.b32.xlu0 %v215, 118
        %v398 = vpop.permute.xlu0 %397
        %399 = vrot.lane.b32.xlu0 %v216, 118
        %v400 = vpop.permute.xlu0 %399
        %401 = vrot.lane.b32.xlu0 %v217, 118
        %v402 = vpop.permute.xlu0 %401
        %403 = vrot.lane.b32.xlu0 %v218, 118
        %v404 = vpop.permute.xlu0 %403
        %405 = vrot.lane.b32.xlu0 %v219, 118
        %v406 = vpop.permute.xlu0 %405
        %407 = vrot.lane.b32.xlu0 %v220, 118
        %v408 = vpop.permute.xlu0 %407
        %409 = vrot.lane.b32.xlu0 %v221, 118
        %v410 = vpop.permute.xlu0 %409
        %vm411 = vcmask 965632
        %v412 = vsel %vm411, %v394, %v396
        %v413 = vsel %vm411, %v396, %v398
        %v414 = vsel %vm411, %v398, %v400
        %v415 = vsel %vm411, %v400, %v402
        %v416 = vsel %vm411, %v402, %v404
        %v417 = vsel %vm411, %v404, %v406
        %v418 = vsel %vm411, %v406, %v408
        %v419 = vsel %vm411, %v408, %v410
        %428 = vst [vmem:[#allocation2 + $0xc0] sm:$0xff] %v412
        %429 = vst [vmem:[#allocation2 + $0xc8] sm:$0xff] %v413
        %430 = vst [vmem:[#allocation2 + $0xd0] sm:$0xff] %v414
        %431 = vst [vmem:[#allocation2 + $0xd8] sm:$0xff] %v415
        %432 = vst [vmem:[#allocation2 + $0xe0] sm:$0xff] %v416
        %433 = vst [vmem:[#allocation2 + $0xe8] sm:$0xff] %v417
        %434 = vst [vmem:[#allocation2 + $0xf0] sm:$0xff] %v418
        %435 = vst [vmem:[#allocation2 + $0xf8] sm:$0xff] %v419
        %436 = vrot.lane.b32.xlu0 %v222, 118
        %v437 = vpop.permute.xlu0 %436
        %v438 = vsel %vm411, %v410, %v437
        %440 = vst [vmem:[#allocation2 + $0x300] sm:$0xff] %v413
        %441 = vst [vmem:[#allocation2 + $0x308] sm:$0xff] %v414
        %442 = vst [vmem:[#allocation2 + $0x310] sm:$0xff] %v415
        %443 = vst [vmem:[#allocation2 + $0x318] sm:$0xff] %v416
        %444 = vst [vmem:[#allocation2 + $0x320] sm:$0xff] %v417
        %445 = vst [vmem:[#allocation2 + $0x328] sm:$0xff] %v418
        %446 = vst [vmem:[#allocation2 + $0x330] sm:$0xff] %v419
        %447 = vst [vmem:[#allocation2 + $0x338] sm:$0xff] %v438
        %448 = vrot.lane.b32.xlu0 %v223, 118
        %v449 = vpop.permute.xlu0 %448
        %v450 = vsel %vm411, %v437, %v449
        %452 = vst [vmem:[#allocation2 + $0x540] sm:$0xff] %v414
        %453 = vst [vmem:[#allocation2 + $0x548] sm:$0xff] %v415
        %454 = vst [vmem:[#allocation2 + $0x550] sm:$0xff] %v416
        %455 = vst [vmem:[#allocation2 + $0x558] sm:$0xff] %v417
        %456 = vst [vmem:[#allocation2 + $0x560] sm:$0xff] %v418
        %457 = vst [vmem:[#allocation2 + $0x568] sm:$0xff] %v419
        %458 = vst [vmem:[#allocation2 + $0x570] sm:$0xff] %v438
        %459 = vst [vmem:[#allocation2 + $0x578] sm:$0xff] %v450
        %460 = vrot.lane.b32.xlu0 %v213, 117
        %v461 = vpop.permute.xlu0 %460
        %462 = vrot.lane.b32.xlu0 %v214, 117
        %v463 = vpop.permute.xlu0 %462
        %464 = vrot.lane.b32.xlu0 %v215, 117
        %v465 = vpop.permute.xlu0 %464
        %466 = vrot.lane.b32.xlu0 %v216, 117
        %v467 = vpop.permute.xlu0 %466
        %468 = vrot.lane.b32.xlu0 %v217, 117
        %v469 = vpop.permute.xlu0 %468
        %470 = vrot.lane.b32.xlu0 %v218, 117
        %v471 = vpop.permute.xlu0 %470
        %472 = vrot.lane.b32.xlu0 %v219, 117
        %v473 = vpop.permute.xlu0 %472
        %474 = vrot.lane.b32.xlu0 %v220, 117
        %v475 = vpop.permute.xlu0 %474
        %476 = vrot.lane.b32.xlu0 %v221, 117
        %v477 = vpop.permute.xlu0 %476
        %vm478 = vcmask 957440
        %v479 = vsel %vm478, %v461, %v463
        %v480 = vsel %vm478, %v463, %v465
        %v481 = vsel %vm478, %v465, %v467
        %v482 = vsel %vm478, %v467, %v469
        %v483 = vsel %vm478, %v469, %v471
        %v484 = vsel %vm478, %v471, %v473
        %v485 = vsel %vm478, %v473, %v475
        %v486 = vsel %vm478, %v475, %v477
        %495 = vst [vmem:[#allocation2 + $0x100] sm:$0xff] %v479
        %496 = vst [vmem:[#allocation2 + $0x108] sm:$0xff] %v480
        %497 = vst [vmem:[#allocation2 + $0x110] sm:$0xff] %v481
        %498 = vst [vmem:[#allocation2 + $0x118] sm:$0xff] %v482
        %499 = vst [vmem:[#allocation2 + $0x120] sm:$0xff] %v483
        %500 = vst [vmem:[#allocation2 + $0x128] sm:$0xff] %v484
        %501 = vst [vmem:[#allocation2 + $0x130] sm:$0xff] %v485
        %502 = vst [vmem:[#allocation2 + $0x138] sm:$0xff] %v486
        %503 = vrot.lane.b32.xlu0 %v222, 117
        %v504 = vpop.permute.xlu0 %503
        %v505 = vsel %vm478, %v477, %v504
        %507 = vst [vmem:[#allocation2 + $0x340] sm:$0xff] %v480
        %508 = vst [vmem:[#allocation2 + $0x348] sm:$0xff] %v481
        %509 = vst [vmem:[#allocation2 + $0x350] sm:$0xff] %v482
        %510 = vst [vmem:[#allocation2 + $0x358] sm:$0xff] %v483
        %511 = vst [vmem:[#allocation2 + $0x360] sm:$0xff] %v484
        %512 = vst [vmem:[#allocation2 + $0x368] sm:$0xff] %v485
        %513 = vst [vmem:[#allocation2 + $0x370] sm:$0xff] %v486
        %514 = vst [vmem:[#allocation2 + $0x378] sm:$0xff] %v505
        %515 = vrot.lane.b32.xlu0 %v223, 117
        %v516 = vpop.permute.xlu0 %515
        %v517 = vsel %vm478, %v504, %v516
        %519 = vst [vmem:[#allocation2 + $0x580] sm:$0xff] %v481
        %520 = vst [vmem:[#allocation2 + $0x588] sm:$0xff] %v482
        %521 = vst [vmem:[#allocation2 + $0x590] sm:$0xff] %v483
        %522 = vst [vmem:[#allocation2 + $0x598] sm:$0xff] %v484
        %523 = vst [vmem:[#allocation2 + $0x5a0] sm:$0xff] %v485
        %524 = vst [vmem:[#allocation2 + $0x5a8] sm:$0xff] %v486
        %525 = vst [vmem:[#allocation2 + $0x5b0] sm:$0xff] %v505
        %526 = vst [vmem:[#allocation2 + $0x5b8] sm:$0xff] %v517
        %527 = vrot.lane.b32.xlu0 %v213, 116
        %v528 = vpop.permute.xlu0 %527
        %529 = vrot.lane.b32.xlu0 %v214, 116
        %v530 = vpop.permute.xlu0 %529
        %531 = vrot.lane.b32.xlu0 %v215, 116
        %v532 = vpop.permute.xlu0 %531
        %533 = vrot.lane.b32.xlu0 %v216, 116
        %v534 = vpop.permute.xlu0 %533
        %535 = vrot.lane.b32.xlu0 %v217, 116
        %v536 = vpop.permute.xlu0 %535
        %537 = vrot.lane.b32.xlu0 %v218, 116
        %v538 = vpop.permute.xlu0 %537
        %539 = vrot.lane.b32.xlu0 %v219, 116
        %v540 = vpop.permute.xlu0 %539
        %541 = vrot.lane.b32.xlu0 %v220, 116
        %v542 = vpop.permute.xlu0 %541
        %543 = vrot.lane.b32.xlu0 %v221, 116
        %v544 = vpop.permute.xlu0 %543
        %vm545 = vcmask 949248
        %v546 = vsel %vm545, %v528, %v530
        %v547 = vsel %vm545, %v530, %v532
        %v548 = vsel %vm545, %v532, %v534
        %v549 = vsel %vm545, %v534, %v536
        %v550 = vsel %vm545, %v536, %v538
        %v551 = vsel %vm545, %v538, %v540
        %v552 = vsel %vm545, %v540, %v542
        %v553 = vsel %vm545, %v542, %v544
        %562 = vst [vmem:[#allocation2 + $0x140] sm:$0xff] %v546
        %563 = vst [vmem:[#allocation2 + $0x148] sm:$0xff] %v547
        %564 = vst [vmem:[#allocation2 + $0x150] sm:$0xff] %v548
        %565 = vst [vmem:[#allocation2 + $0x158] sm:$0xff] %v549
        %566 = vst [vmem:[#allocation2 + $0x160] sm:$0xff] %v550
        %567 = vst [vmem:[#allocation2 + $0x168] sm:$0xff] %v551
        %568 = vst [vmem:[#allocation2 + $0x170] sm:$0xff] %v552
        %569 = vst [vmem:[#allocation2 + $0x178] sm:$0xff] %v553
        %570 = vrot.lane.b32.xlu0 %v222, 116
        %v571 = vpop.permute.xlu0 %570
        %v572 = vsel %vm545, %v544, %v571
        %574 = vst [vmem:[#allocation2 + $0x380] sm:$0xff] %v547
        %575 = vst [vmem:[#allocation2 + $0x388] sm:$0xff] %v548
        %576 = vst [vmem:[#allocation2 + $0x390] sm:$0xff] %v549
        %577 = vst [vmem:[#allocation2 + $0x398] sm:$0xff] %v550
        %578 = vst [vmem:[#allocation2 + $0x3a0] sm:$0xff] %v551
        %579 = vst [vmem:[#allocation2 + $0x3a8] sm:$0xff] %v552
        %580 = vst [vmem:[#allocation2 + $0x3b0] sm:$0xff] %v553
        %581 = vst [vmem:[#allocation2 + $0x3b8] sm:$0xff] %v572
        %582 = vrot.lane.b32.xlu0 %v223, 116
        %v583 = vpop.permute.xlu0 %582
        %v584 = vsel %vm545, %v571, %v583
        %586 = vst [vmem:[#allocation2 + $0x5c0] sm:$0xff] %v548
        %587 = vst [vmem:[#allocation2 + $0x5c8] sm:$0xff] %v549
        %588 = vst [vmem:[#allocation2 + $0x5d0] sm:$0xff] %v550
        %589 = vst [vmem:[#allocation2 + $0x5d8] sm:$0xff] %v551
        %590 = vst [vmem:[#allocation2 + $0x5e0] sm:$0xff] %v552
        %591 = vst [vmem:[#allocation2 + $0x5e8] sm:$0xff] %v553
        %592 = vst [vmem:[#allocation2 + $0x5f0] sm:$0xff] %v572
        %593 = vst [vmem:[#allocation2 + $0x5f8] sm:$0xff] %v584
        %594 = vrot.lane.b32.xlu0 %v213, 108
        %v595 = vpop.permute.xlu0 %594
        %596 = vrot.lane.b32.xlu0 %v214, 108
        %v597 = vpop.permute.xlu0 %596
        %598 = vrot.lane.b32.xlu0 %v215, 108
        %v599 = vpop.permute.xlu0 %598
        %600 = vrot.lane.b32.xlu0 %v216, 108
        %v601 = vpop.permute.xlu0 %600
        %602 = vrot.lane.b32.xlu0 %v217, 108
        %v603 = vpop.permute.xlu0 %602
        %604 = vrot.lane.b32.xlu0 %v218, 108
        %v605 = vpop.permute.xlu0 %604
        %606 = vrot.lane.b32.xlu0 %v219, 108
        %v607 = vpop.permute.xlu0 %606
        %608 = vrot.lane.b32.xlu0 %v220, 108
        %v609 = vpop.permute.xlu0 %608
        %610 = vrot.lane.b32.xlu0 %v221, 108
        %v611 = vpop.permute.xlu0 %610
        %vm612 = vcmask 883712
        %v613 = vsel %vm612, %v595, %v597
        %v614 = vsel %vm612, %v597, %v599
        %v615 = vsel %vm612, %v599, %v601
        %v616 = vsel %vm612, %v601, %v603
        %v617 = vsel %vm612, %v603, %v605
        %v618 = vsel %vm612, %v605, %v607
        %v619 = vsel %vm612, %v607, %v609
        %v620 = vsel %vm612, %v609, %v611
        %629 = vst [vmem:[#allocation2 + $0x180] sm:$0xff] %v613
        %630 = vst [vmem:[#allocation2 + $0x188] sm:$0xff] %v614
        %631 = vst [vmem:[#allocation2 + $0x190] sm:$0xff] %v615
        %632 = vst [vmem:[#allocation2 + $0x198] sm:$0xff] %v616
        %633 = vst [vmem:[#allocation2 + $0x1a0] sm:$0xff] %v617
        %634 = vst [vmem:[#allocation2 + $0x1a8] sm:$0xff] %v618
        %635 = vst [vmem:[#allocation2 + $0x1b0] sm:$0xff] %v619
        %636 = vst [vmem:[#allocation2 + $0x1b8] sm:$0xff] %v620
        %637 = vrot.lane.b32.xlu0 %v222, 108
        %v638 = vpop.permute.xlu0 %637
        %v639 = vsel %vm612, %v611, %v638
        %641 = vst [vmem:[#allocation2 + $0x3c0] sm:$0xff] %v614
        %642 = vst [vmem:[#allocation2 + $0x3c8] sm:$0xff] %v615
        %643 = vst [vmem:[#allocation2 + $0x3d0] sm:$0xff] %v616
        %644 = vst [vmem:[#allocation2 + $0x3d8] sm:$0xff] %v617
        %645 = vst [vmem:[#allocation2 + $0x3e0] sm:$0xff] %v618
        %646 = vst [vmem:[#allocation2 + $0x3e8] sm:$0xff] %v619
        %647 = vst [vmem:[#allocation2 + $0x3f0] sm:$0xff] %v620
        %648 = vst [vmem:[#allocation2 + $0x3f8] sm:$0xff] %v639
        %649 = vrot.lane.b32.xlu0 %v223, 108
        %v650 = vpop.permute.xlu0 %649
        %v651 = vsel %vm612, %v638, %v650
        %653 = vst [vmem:[#allocation2 + $0x600] sm:$0xff] %v615
        %654 = vst [vmem:[#allocation2 + $0x608] sm:$0xff] %v616
        %655 = vst [vmem:[#allocation2 + $0x610] sm:$0xff] %v617
        %656 = vst [vmem:[#allocation2 + $0x618] sm:$0xff] %v618
        %657 = vst [vmem:[#allocation2 + $0x620] sm:$0xff] %v619
        %658 = vst [vmem:[#allocation2 + $0x628] sm:$0xff] %v620
        %659 = vst [vmem:[#allocation2 + $0x630] sm:$0xff] %v639
        %660 = vst [vmem:[#allocation2 + $0x638] sm:$0xff] %v651
        %661 = vrot.lane.b32.xlu0 %v213, 107
        %v662 = vpop.permute.xlu0 %661
        %663 = vrot.lane.b32.xlu0 %v214, 107
        %v664 = vpop.permute.xlu0 %663
        %665 = vrot.lane.b32.xlu0 %v215, 107
        %v666 = vpop.permute.xlu0 %665
        %667 = vrot.lane.b32.xlu0 %v216, 107
        %v668 = vpop.permute.xlu0 %667
        %669 = vrot.lane.b32.xlu0 %v217, 107
        %v670 = vpop.permute.xlu0 %669
        %671 = vrot.lane.b32.xlu0 %v218, 107
        %v672 = vpop.permute.xlu0 %671
        %673 = vrot.lane.b32.xlu0 %v219, 107
        %v674 = vpop.permute.xlu0 %673
        %675 = vrot.lane.b32.xlu0 %v220, 107
        %v676 = vpop.permute.xlu0 %675
        %677 = vrot.lane.b32.xlu0 %v221, 107
        %v678 = vpop.permute.xlu0 %677
        %vm679 = vcmask 875520
        %v680 = vsel %vm679, %v662, %v664
        %v681 = vsel %vm679, %v664, %v666
        %v682 = vsel %vm679, %v666, %v668
        %v683 = vsel %vm679, %v668, %v670
        %v684 = vsel %vm679, %v670, %v672
        %v685 = vsel %vm679, %v672, %v674
        %v686 = vsel %vm679, %v674, %v676
        %v687 = vsel %vm679, %v676, %v678
        %696 = vst [vmem:[#allocation2 + $0x1c0] sm:$0xff] %v680
        %697 = vst [vmem:[#allocation2 + $0x1c8] sm:$0xff] %v681
        %698 = vst [vmem:[#allocation2 + $0x1d0] sm:$0xff] %v682
        %699 = vst [vmem:[#allocation2 + $0x1d8] sm:$0xff] %v683
        %700 = vst [vmem:[#allocation2 + $0x1e0] sm:$0xff] %v684
        %701 = vst [vmem:[#allocation2 + $0x1e8] sm:$0xff] %v685
        %702 = vst [vmem:[#allocation2 + $0x1f0] sm:$0xff] %v686
        %703 = vst [vmem:[#allocation2 + $0x1f8] sm:$0xff] %v687
        %704 = vrot.lane.b32.xlu0 %v222, 107
        %v705 = vpop.permute.xlu0 %704
        %v706 = vsel %vm679, %v678, %v705
        %708 = vst [vmem:[#allocation2 + $0x400] sm:$0xff] %v681
        %709 = vst [vmem:[#allocation2 + $0x408] sm:$0xff] %v682
        %710 = vst [vmem:[#allocation2 + $0x410] sm:$0xff] %v683
        %711 = vst [vmem:[#allocation2 + $0x418] sm:$0xff] %v684
        %712 = vst [vmem:[#allocation2 + $0x420] sm:$0xff] %v685
        %713 = vst [vmem:[#allocation2 + $0x428] sm:$0xff] %v686
        %714 = vst [vmem:[#allocation2 + $0x430] sm:$0xff] %v687
        %715 = vst [vmem:[#allocation2 + $0x438] sm:$0xff] %v706
        %716 = vrot.lane.b32.xlu0 %v223, 107
        %v717 = vpop.permute.xlu0 %716
        %v718 = vsel %vm679, %v705, %v717
        %720 = vst [vmem:[#allocation2 + $0x640] sm:$0xff] %v682
        %721 = vst [vmem:[#allocation2 + $0x648] sm:$0xff] %v683
        %722 = vst [vmem:[#allocation2 + $0x650] sm:$0xff] %v684
        %723 = vst [vmem:[#allocation2 + $0x658] sm:$0xff] %v685
        %724 = vst [vmem:[#allocation2 + $0x660] sm:$0xff] %v686
        %725 = vst [vmem:[#allocation2 + $0x668] sm:$0xff] %v687
        %726 = vst [vmem:[#allocation2 + $0x670] sm:$0xff] %v706
        %727 = vst [vmem:[#allocation2 + $0x678] sm:$0xff] %v718
        %728 = vrot.lane.b32.xlu0 %v213, 106
        %v729 = vpop.permute.xlu0 %728
        %730 = vrot.lane.b32.xlu0 %v214, 106
        %v731 = vpop.permute.xlu0 %730
        %732 = vrot.lane.b32.xlu0 %v215, 106
        %v733 = vpop.permute.xlu0 %732
        %734 = vrot.lane.b32.xlu0 %v216, 106
        %v735 = vpop.permute.xlu0 %734
        %736 = vrot.lane.b32.xlu0 %v217, 106
        %v737 = vpop.permute.xlu0 %736
        %738 = vrot.lane.b32.xlu0 %v218, 106
        %v739 = vpop.permute.xlu0 %738
        %740 = vrot.lane.b32.xlu0 %v219, 106
        %v741 = vpop.permute.xlu0 %740
        %742 = vrot.lane.b32.xlu0 %v220, 106
        %v743 = vpop.permute.xlu0 %742
        %744 = vrot.lane.b32.xlu0 %v221, 106
        %v745 = vpop.permute.xlu0 %744
        %vm746 = vcmask 867328
        %v747 = vsel %vm746, %v729, %v731
        %v748 = vsel %vm746, %v731, %v733
        %v749 = vsel %vm746, %v733, %v735
        %v750 = vsel %vm746, %v735, %v737
        %v751 = vsel %vm746, %v737, %v739
        %v752 = vsel %vm746, %v739, %v741
        %v753 = vsel %vm746, %v741, %v743
        %v754 = vsel %vm746, %v743, %v745
        %763 = vst [vmem:[#allocation2 + $0x200] sm:$0xff] %v747
        %764 = vst [vmem:[#allocation2 + $0x208] sm:$0xff] %v748
        %765 = vst [vmem:[#allocation2 + $0x210] sm:$0xff] %v749
        %766 = vst [vmem:[#allocation2 + $0x218] sm:$0xff] %v750
        %767 = vst [vmem:[#allocation2 + $0x220] sm:$0xff] %v751
        %768 = vst [vmem:[#allocation2 + $0x228] sm:$0xff] %v752
        %769 = vst [vmem:[#allocation2 + $0x230] sm:$0xff] %v753
        %770 = vst [vmem:[#allocation2 + $0x238] sm:$0xff] %v754
        %771 = vrot.lane.b32.xlu0 %v222, 106
        %v772 = vpop.permute.xlu0 %771
        %v773 = vsel %vm746, %v745, %v772
        %775 = vst [vmem:[#allocation2 + $0x440] sm:$0xff] %v748
        %776 = vst [vmem:[#allocation2 + $0x448] sm:$0xff] %v749
        %777 = vst [vmem:[#allocation2 + $0x450] sm:$0xff] %v750
        %778 = vst [vmem:[#allocation2 + $0x458] sm:$0xff] %v751
        %779 = vst [vmem:[#allocation2 + $0x460] sm:$0xff] %v752
        %780 = vst [vmem:[#allocation2 + $0x468] sm:$0xff] %v753
        %781 = vst [vmem:[#allocation2 + $0x470] sm:$0xff] %v754
        %782 = vst [vmem:[#allocation2 + $0x478] sm:$0xff] %v773
        %783 = vrot.lane.b32.xlu0 %v223, 106
        %v784 = vpop.permute.xlu0 %783
        %v785 = vsel %vm746, %v772, %v784
        %787 = vst [vmem:[#allocation2 + $0x680] sm:$0xff] %v749
        %788 = vst [vmem:[#allocation2 + $0x688] sm:$0xff] %v750
        %789 = vst [vmem:[#allocation2 + $0x690] sm:$0xff] %v751
        %790 = vst [vmem:[#allocation2 + $0x698] sm:$0xff] %v752
        %791 = vst [vmem:[#allocation2 + $0x6a0] sm:$0xff] %v753
        %792 = vst [vmem:[#allocation2 + $0x6a8] sm:$0xff] %v754
        %793 = vst [vmem:[#allocation2 + $0x6b0] sm:$0xff] %v773
        %794 = vst [vmem:[#allocation2 + $0x6b8] sm:$0xff] %v785
        %v795 = vld [vmem:[#allocation6] sm:$0xff]
        %v796 = vld [vmem:[#allocation6 + $0x8] sm:$0xff]
        %v797 = vld [vmem:[#allocation2] sm:$0xff]
        %v798 = vld [vmem:[#allocation2 + $0x8] sm:$0xff]
        %v799 = vld [vmem:[#allocation2 + $0x10] sm:$0xff]
        %v800 = vld [vmem:[#allocation2 + $0x18] sm:$0xff]
        %v801 = vld [vmem:[#allocation2 + $0x20] sm:$0xff]
        %v802 = vld [vmem:[#allocation2 + $0x28] sm:$0xff]
        %v803 = vld [vmem:[#allocation2 + $0x30] sm:$0xff]
        %v804 = vld [vmem:[#allocation2 + $0x38] sm:$0xff]
        %v805 = vld [vmem:[#allocation2 + $0x40] sm:$0xff]
        %v806 = vld [vmem:[#allocation2 + $0x48] sm:$0xff]
        %v807 = vld [vmem:[#allocation2 + $0x50] sm:$0xff]
        %v808 = vld [vmem:[#allocation2 + $0x58] sm:$0xff]
        %v809 = vld [vmem:[#allocation2 + $0x60] sm:$0xff]
        %v810 = vld [vmem:[#allocation2 + $0x68] sm:$0xff]
        %v811 = vld [vmem:[#allocation2 + $0x70] sm:$0xff]
        %v812 = vld [vmem:[#allocation2 + $0x78] sm:$0xff]
        %v813 = vld [vmem:[#allocation2 + $0x80] sm:$0xff]
        %v814 = vld [vmem:[#allocation2 + $0x88] sm:$0xff]
        %v815 = vld [vmem:[#allocation2 + $0x90] sm:$0xff]
        %v816 = vld [vmem:[#allocation2 + $0x98] sm:$0xff]
        %v817 = vld [vmem:[#allocation2 + $0xa0] sm:$0xff]
        %v818 = vld [vmem:[#allocation2 + $0xa8] sm:$0xff]
        %v819 = vld [vmem:[#allocation2 + $0xb0] sm:$0xff]
        %v820 = vld [vmem:[#allocation2 + $0xb8] sm:$0xff]
        %v821 = vld [vmem:[#allocation2 + $0xc0] sm:$0xff]
        %v822 = vld [vmem:[#allocation2 + $0xc8] sm:$0xff]
        %v823 = vld [vmem:[#allocation2 + $0xd0] sm:$0xff]
        %v824 = vld [vmem:[#allocation2 + $0xd8] sm:$0xff]
        %v825 = vld [vmem:[#allocation2 + $0xe0] sm:$0xff]
        %v826 = vld [vmem:[#allocation2 + $0xe8] sm:$0xff]
        %v827 = vld [vmem:[#allocation2 + $0xf0] sm:$0xff]
        %v828 = vld [vmem:[#allocation2 + $0xf8] sm:$0xff]
        %v829 = vld [vmem:[#allocation2 + $0x100] sm:$0xff]
        %v830 = vld [vmem:[#allocation2 + $0x108] sm:$0xff]
        %v831 = vld [vmem:[#allocation2 + $0x110] sm:$0xff]
        %v832 = vld [vmem:[#allocation2 + $0x118] sm:$0xff]
        %v833 = vld [vmem:[#allocation2 + $0x120] sm:$0xff]
        %v834 = vld [vmem:[#allocation2 + $0x128] sm:$0xff]
        %v835 = vld [vmem:[#allocation2 + $0x130] sm:$0xff]
        %v836 = vld [vmem:[#allocation2 + $0x138] sm:$0xff]
        %v837 = vld [vmem:[#allocation2 + $0x140] sm:$0xff]
        %v838 = vld [vmem:[#allocation2 + $0x148] sm:$0xff]
        %v839 = vld [vmem:[#allocation2 + $0x150] sm:$0xff]
        %v840 = vld [vmem:[#allocation2 + $0x158] sm:$0xff]
        %v841 = vld [vmem:[#allocation2 + $0x160] sm:$0xff]
        %v842 = vld [vmem:[#allocation2 + $0x168] sm:$0xff]
        %v843 = vld [vmem:[#allocation2 + $0x170] sm:$0xff]
        %v844 = vld [vmem:[#allocation2 + $0x178] sm:$0xff]
        %v845 = vld [vmem:[#allocation2 + $0x180] sm:$0xff]
        %v846 = vld [vmem:[#allocation2 + $0x188] sm:$0xff]
        %v847 = vld [vmem:[#allocation2 + $0x190] sm:$0xff]
        %v848 = vld [vmem:[#allocation2 + $0x198] sm:$0xff]
        %v849 = vld [vmem:[#allocation2 + $0x1a0] sm:$0xff]
        %v850 = vld [vmem:[#allocation2 + $0x1a8] sm:$0xff]
        %v851 = vld [vmem:[#allocation2 + $0x1b0] sm:$0xff]
        %v852 = vld [vmem:[#allocation2 + $0x1b8] sm:$0xff]
        %v853 = vld [vmem:[#allocation2 + $0x1c0] sm:$0xff]
        %v854 = vld [vmem:[#allocation2 + $0x1c8] sm:$0xff]
        %v855 = vld [vmem:[#allocation2 + $0x1d0] sm:$0xff]
        %v856 = vld [vmem:[#allocation2 + $0x1d8] sm:$0xff]
        %v857 = vld [vmem:[#allocation2 + $0x1e0] sm:$0xff]
        %v858 = vld [vmem:[#allocation2 + $0x1e8] sm:$0xff]
        %v859 = vld [vmem:[#allocation2 + $0x1f0] sm:$0xff]
        %v860 = vld [vmem:[#allocation2 + $0x1f8] sm:$0xff]
        %v861 = vld [vmem:[#allocation2 + $0x200] sm:$0xff]
        %v862 = vld [vmem:[#allocation2 + $0x208] sm:$0xff]
        %v863 = vld [vmem:[#allocation2 + $0x210] sm:$0xff]
        %v864 = vld [vmem:[#allocation2 + $0x218] sm:$0xff]
        %v865 = vld [vmem:[#allocation2 + $0x220] sm:$0xff]
        %v866 = vld [vmem:[#allocation2 + $0x228] sm:$0xff]
        %v867 = vld [vmem:[#allocation2 + $0x230] sm:$0xff]
        %v868 = vld [vmem:[#allocation2 + $0x238] sm:$0xff]
        %v869 = vld [vmem:[#allocation2 + $0x240] sm:$0xff]
        %v870 = vld [vmem:[#allocation2 + $0x248] sm:$0xff]
        %v871 = vld [vmem:[#allocation2 + $0x250] sm:$0xff]
        %v872 = vld [vmem:[#allocation2 + $0x258] sm:$0xff]
        %v873 = vld [vmem:[#allocation2 + $0x260] sm:$0xff]
        %v874 = vld [vmem:[#allocation2 + $0x268] sm:$0xff]
        %v875 = vld [vmem:[#allocation2 + $0x270] sm:$0xff]
        %v876 = vld [vmem:[#allocation2 + $0x278] sm:$0xff]
        %v877 = vld [vmem:[#allocation2 + $0x280] sm:$0xff]
        %v878 = vld [vmem:[#allocation2 + $0x288] sm:$0xff]
        %v879 = vld [vmem:[#allocation2 + $0x290] sm:$0xff]
        %v880 = vld [vmem:[#allocation2 + $0x298] sm:$0xff]
        %v881 = vld [vmem:[#allocation2 + $0x2a0] sm:$0xff]
        %v882 = vld [vmem:[#allocation2 + $0x2a8] sm:$0xff]
        %v883 = vld [vmem:[#allocation2 + $0x2b0] sm:$0xff]
        %v884 = vld [vmem:[#allocation2 + $0x2b8] sm:$0xff]
        %v885 = vld [vmem:[#allocation2 + $0x2c0] sm:$0xff]
        %v886 = vld [vmem:[#allocation2 + $0x2c8] sm:$0xff]
        %v887 = vld [vmem:[#allocation2 + $0x2d0] sm:$0xff]
        %v888 = vld [vmem:[#allocation2 + $0x2d8] sm:$0xff]
        %v889 = vld [vmem:[#allocation2 + $0x2e0] sm:$0xff]
        %v890 = vld [vmem:[#allocation2 + $0x2e8] sm:$0xff]
        %v891 = vld [vmem:[#allocation2 + $0x2f0] sm:$0xff]
        %v892 = vld [vmem:[#allocation2 + $0x2f8] sm:$0xff]
        %v893 = vld [vmem:[#allocation2 + $0x300] sm:$0xff]
        %v894 = vld [vmem:[#allocation2 + $0x308] sm:$0xff]
        %v895 = vld [vmem:[#allocation2 + $0x310] sm:$0xff]
        %v896 = vld [vmem:[#allocation2 + $0x318] sm:$0xff]
        %v897 = vld [vmem:[#allocation2 + $0x320] sm:$0xff]
        %v898 = vld [vmem:[#allocation2 + $0x328] sm:$0xff]
        %v899 = vld [vmem:[#allocation2 + $0x330] sm:$0xff]
        %v900 = vld [vmem:[#allocation2 + $0x338] sm:$0xff]
        %v901 = vld [vmem:[#allocation2 + $0x340] sm:$0xff]
        %v902 = vld [vmem:[#allocation2 + $0x348] sm:$0xff]
        %v903 = vld [vmem:[#allocation2 + $0x350] sm:$0xff]
        %v904 = vld [vmem:[#allocation2 + $0x358] sm:$0xff]
        %v905 = vld [vmem:[#allocation2 + $0x360] sm:$0xff]
        %v906 = vld [vmem:[#allocation2 + $0x368] sm:$0xff]
        %v907 = vld [vmem:[#allocation2 + $0x370] sm:$0xff]
        %v908 = vld [vmem:[#allocation2 + $0x378] sm:$0xff]
        %v909 = vld [vmem:[#allocation2 + $0x380] sm:$0xff]
        %v910 = vld [vmem:[#allocation2 + $0x388] sm:$0xff]
        %v911 = vld [vmem:[#allocation2 + $0x390] sm:$0xff]
        %v912 = vld [vmem:[#allocation2 + $0x398] sm:$0xff]
        %v913 = vld [vmem:[#allocation2 + $0x3a0] sm:$0xff]
        %v914 = vld [vmem:[#allocation2 + $0x3a8] sm:$0xff]
        %v915 = vld [vmem:[#allocation2 + $0x3b0] sm:$0xff]
        %v916 = vld [vmem:[#allocation2 + $0x3b8] sm:$0xff]
        %v917 = vld [vmem:[#allocation2 + $0x3c0] sm:$0xff]
        %v918 = vld [vmem:[#allocation2 + $0x3c8] sm:$0xff]
        %v919 = vld [vmem:[#allocation2 + $0x3d0] sm:$0xff]
        %v920 = vld [vmem:[#allocation2 + $0x3d8] sm:$0xff]
        %v921 = vld [vmem:[#allocation2 + $0x3e0] sm:$0xff]
        %v922 = vld [vmem:[#allocation2 + $0x3e8] sm:$0xff]
        %v923 = vld [vmem:[#allocation2 + $0x3f0] sm:$0xff]
        %v924 = vld [vmem:[#allocation2 + $0x3f8] sm:$0xff]
        %v925 = vld [vmem:[#allocation2 + $0x400] sm:$0xff]
        %v926 = vld [vmem:[#allocation2 + $0x408] sm:$0xff]
        %v927 = vld [vmem:[#allocation2 + $0x410] sm:$0xff]
        %v928 = vld [vmem:[#allocation2 + $0x418] sm:$0xff]
        %v929 = vld [vmem:[#allocation2 + $0x420] sm:$0xff]
        %v930 = vld [vmem:[#allocation2 + $0x428] sm:$0xff]
        %v931 = vld [vmem:[#allocation2 + $0x430] sm:$0xff]
        %v932 = vld [vmem:[#allocation2 + $0x438] sm:$0xff]
        %v933 = vld [vmem:[#allocation2 + $0x440] sm:$0xff]
        %v934 = vld [vmem:[#allocation2 + $0x448] sm:$0xff]
        %v935 = vld [vmem:[#allocation2 + $0x450] sm:$0xff]
        %v936 = vld [vmem:[#allocation2 + $0x458] sm:$0xff]
        %v937 = vld [vmem:[#allocation2 + $0x460] sm:$0xff]
        %v938 = vld [vmem:[#allocation2 + $0x468] sm:$0xff]
        %v939 = vld [vmem:[#allocation2 + $0x470] sm:$0xff]
        %v940 = vld [vmem:[#allocation2 + $0x478] sm:$0xff]
        %v941 = vld [vmem:[#allocation2 + $0x480] sm:$0xff]
        %v942 = vld [vmem:[#allocation2 + $0x488] sm:$0xff]
        %v943 = vld [vmem:[#allocation2 + $0x490] sm:$0xff]
        %v944 = vld [vmem:[#allocation2 + $0x498] sm:$0xff]
        %v945 = vld [vmem:[#allocation2 + $0x4a0] sm:$0xff]
        %v946 = vld [vmem:[#allocation2 + $0x4a8] sm:$0xff]
        %v947 = vld [vmem:[#allocation2 + $0x4b0] sm:$0xff]
        %v948 = vld [vmem:[#allocation2 + $0x4b8] sm:$0xff]
        %v949 = vld [vmem:[#allocation2 + $0x4c0] sm:$0xff]
        %v950 = vld [vmem:[#allocation2 + $0x4c8] sm:$0xff]
        %v951 = vld [vmem:[#allocation2 + $0x4d0] sm:$0xff]
        %v952 = vld [vmem:[#allocation2 + $0x4d8] sm:$0xff]
        %v953 = vld [vmem:[#allocation2 + $0x4e0] sm:$0xff]
        %v954 = vld [vmem:[#allocation2 + $0x4e8] sm:$0xff]
        %v955 = vld [vmem:[#allocation2 + $0x4f0] sm:$0xff]
        %v956 = vld [vmem:[#allocation2 + $0x4f8] sm:$0xff]
        %v957 = vld [vmem:[#allocation2 + $0x500] sm:$0xff]
        %v958 = vld [vmem:[#allocation2 + $0x508] sm:$0xff]
        %v959 = vld [vmem:[#allocation2 + $0x510] sm:$0xff]
        %v960 = vld [vmem:[#allocation2 + $0x518] sm:$0xff]
        %v961 = vld [vmem:[#allocation2 + $0x520] sm:$0xff]
        %v962 = vld [vmem:[#allocation2 + $0x528] sm:$0xff]
        %v963 = vld [vmem:[#allocation2 + $0x530] sm:$0xff]
        %v964 = vld [vmem:[#allocation2 + $0x538] sm:$0xff]
        %v965 = vld [vmem:[#allocation2 + $0x540] sm:$0xff]
        %v966 = vld [vmem:[#allocation2 + $0x548] sm:$0xff]
        %v967 = vld [vmem:[#allocation2 + $0x550] sm:$0xff]
        %v968 = vld [vmem:[#allocation2 + $0x558] sm:$0xff]
        %v969 = vld [vmem:[#allocation2 + $0x560] sm:$0xff]
        %v970 = vld [vmem:[#allocation2 + $0x568] sm:$0xff]
        %v971 = vld [vmem:[#allocation2 + $0x570] sm:$0xff]
        %v972 = vld [vmem:[#allocation2 + $0x578] sm:$0xff]
        %v973 = vld [vmem:[#allocation2 + $0x580] sm:$0xff]
        %v974 = vld [vmem:[#allocation2 + $0x588] sm:$0xff]
        %v975 = vld [vmem:[#allocation2 + $0x590] sm:$0xff]
        %v976 = vld [vmem:[#allocation2 + $0x598] sm:$0xff]
        %v977 = vld [vmem:[#allocation2 + $0x5a0] sm:$0xff]
        %v978 = vld [vmem:[#allocation2 + $0x5a8] sm:$0xff]
        %v979 = vld [vmem:[#allocation2 + $0x5b0] sm:$0xff]
        %v980 = vld [vmem:[#allocation2 + $0x5b8] sm:$0xff]
        %v981 = vld [vmem:[#allocation2 + $0x5c0] sm:$0xff]
        %v982 = vld [vmem:[#allocation2 + $0x5c8] sm:$0xff]
        %v983 = vld [vmem:[#allocation2 + $0x5d0] sm:$0xff]
        %v984 = vld [vmem:[#allocation2 + $0x5d8] sm:$0xff]
        %v985 = vld [vmem:[#allocation2 + $0x5e0] sm:$0xff]
        %v986 = vld [vmem:[#allocation2 + $0x5e8] sm:$0xff]
        %v987 = vld [vmem:[#allocation2 + $0x5f0] sm:$0xff]
        %v988 = vld [vmem:[#allocation2 + $0x5f8] sm:$0xff]
        %v989 = vld [vmem:[#allocation2 + $0x600] sm:$0xff]
        %v990 = vld [vmem:[#allocation2 + $0x608] sm:$0xff]
        %v991 = vld [vmem:[#allocation2 + $0x610] sm:$0xff]
        %v992 = vld [vmem:[#allocation2 + $0x618] sm:$0xff]
        %v993 = vld [vmem:[#allocation2 + $0x620] sm:$0xff]
        %v994 = vld [vmem:[#allocation2 + $0x628] sm:$0xff]
        %v995 = vld [vmem:[#allocation2 + $0x630] sm:$0xff]
        %v996 = vld [vmem:[#allocation2 + $0x638] sm:$0xff]
        %v997 = vld [vmem:[#allocation2 + $0x640] sm:$0xff]
        %v998 = vld [vmem:[#allocation2 + $0x648] sm:$0xff]
        %v999 = vld [vmem:[#allocation2 + $0x650] sm:$0xff]
        %v1000 = vld [vmem:[#allocation2 + $0x658] sm:$0xff]
        %v1001 = vld [vmem:[#allocation2 + $0x660] sm:$0xff]
        %v1002 = vld [vmem:[#allocation2 + $0x668] sm:$0xff]
        %v1003 = vld [vmem:[#allocation2 + $0x670] sm:$0xff]
        %v1004 = vld [vmem:[#allocation2 + $0x678] sm:$0xff]
        %v1005 = vld [vmem:[#allocation2 + $0x680] sm:$0xff]
        %v1006 = vld [vmem:[#allocation2 + $0x688] sm:$0xff]
        %v1007 = vld [vmem:[#allocation2 + $0x690] sm:$0xff]
        %v1008 = vld [vmem:[#allocation2 + $0x698] sm:$0xff]
        %v1009 = vld [vmem:[#allocation2 + $0x6a0] sm:$0xff]
        %v1010 = vld [vmem:[#allocation2 + $0x6a8] sm:$0xff]
        %v1011 = vld [vmem:[#allocation2 + $0x6b0] sm:$0xff]
        %v1012 = vld [vmem:[#allocation2 + $0x6b8] sm:$0xff]
        %v1013 = vld [vmem:[#allocation2 + $0x6c0] sm:$0xff]
        %v1014 = vld [vmem:[#allocation2 + $0x6c8] sm:$0xff]
        %v1015 = vld [vmem:[#allocation2 + $0x6d0] sm:$0xff]
        %v1016 = vld [vmem:[#allocation2 + $0x6d8] sm:$0xff]
        %v1017 = vld [vmem:[#allocation2 + $0x6e0] sm:$0xff]
        %v1018 = vld [vmem:[#allocation2 + $0x6e8] sm:$0xff]
        %v1019 = vld [vmem:[#allocation2 + $0x6f0] sm:$0xff]
        %v1020 = vld [vmem:[#allocation2 + $0x6f8] sm:$0xff]
        %v1021 = vld [vmem:[#allocation2 + $0x700] sm:$0xff]
        %v1022 = vld [vmem:[#allocation2 + $0x708] sm:$0xff]
        %v1023 = vld [vmem:[#allocation2 + $0x710] sm:$0xff]
        %v1024 = vld [vmem:[#allocation2 + $0x718] sm:$0xff]
        %v1025 = vld [vmem:[#allocation2 + $0x720] sm:$0xff]
        %v1026 = vld [vmem:[#allocation2 + $0x728] sm:$0xff]
        %v1027 = vld [vmem:[#allocation2 + $0x730] sm:$0xff]
        %v1028 = vld [vmem:[#allocation2 + $0x738] sm:$0xff]
        %v1029 = vld [vmem:[#allocation2 + $0x740] sm:$0xff]
        %v1030 = vld [vmem:[#allocation2 + $0x748] sm:$0xff]
        %v1031 = vld [vmem:[#allocation2 + $0x750] sm:$0xff]
        %v1032 = vld [vmem:[#allocation2 + $0x758] sm:$0xff]
        %v1033 = vld [vmem:[#allocation2 + $0x760] sm:$0xff]
        %v1034 = vld [vmem:[#allocation2 + $0x768] sm:$0xff]
        %v1035 = vld [vmem:[#allocation2 + $0x770] sm:$0xff]
        %v1036 = vld [vmem:[#allocation2 + $0x778] sm:$0xff]
        %v1037 = vld [vmem:[#allocation2 + $0x780] sm:$0xff]
        %v1038 = vld [vmem:[#allocation2 + $0x788] sm:$0xff]
        %v1039 = vld [vmem:[#allocation2 + $0x790] sm:$0xff]
        %v1040 = vld [vmem:[#allocation2 + $0x798] sm:$0xff]
        %v1041 = vld [vmem:[#allocation2 + $0x7a0] sm:$0xff]
        %v1042 = vld [vmem:[#allocation2 + $0x7a8] sm:$0xff]
        %v1043 = vld [vmem:[#allocation2 + $0x7b0] sm:$0xff]
        %v1044 = vld [vmem:[#allocation2 + $0x7b8] sm:$0xff]
        %v1045 = vld [vmem:[#allocation2 + $0x7c0] sm:$0xff]
        %v1046 = vld [vmem:[#allocation2 + $0x7c8] sm:$0xff]
        %v1047 = vld [vmem:[#allocation2 + $0x7d0] sm:$0xff]
        %v1048 = vld [vmem:[#allocation2 + $0x7d8] sm:$0xff]
        %v1049 = vld [vmem:[#allocation2 + $0x7e0] sm:$0xff]
        %v1050 = vld [vmem:[#allocation2 + $0x7e8] sm:$0xff]
        %v1051 = vld [vmem:[#allocation2 + $0x7f0] sm:$0xff]
        %v1052 = vld [vmem:[#allocation2 + $0x7f8] sm:$0xff]
        %1053 = vmatprep.subr.mxu0 %v798
        %1054 = vmatpush1.msra.mxu0 %v797
        %1055 = vmatprep.subr.mxu0 %v806
        %1056 = vmatpush1.msra.mxu0 %v805
        %1057 = vmatprep.subr.mxu0 %v814
        %1058 = vmatpush1.msra.mxu0 %v813
        %1059 = vmatprep.subr.mxu0 %v822
        %1060 = vmatpush1.msra.mxu0 %v821
        %1061 = vmatprep.subr.mxu0 %v830
        %1062 = vmatpush1.msra.mxu0 %v829
        %1063 = vmatprep.subr.mxu0 %v838
        %1064 = vmatpush1.msra.mxu0 %v837
        %1065 = vmatprep.subr.mxu0 %v846
        %1066 = vmatpush1.msra.mxu0 %v845
        %1067 = vmatprep.subr.mxu0 %v854
        %1068 = vmatpush1.msra.mxu0 %v853
        %1069 = vmatprep.subr.mxu0 %v862
        %1070 = vmatpush1.msra.mxu0 %v861
        %1071 = vmatprep.subr.mxu0 %v870
        %1072 = vmatpush1.msra.mxu0 %v869
        %1073 = vmatprep.subr.mxu0 %v878
        %1074 = vmatpush1.msra.mxu0 %v877
        %1075 = vmatprep.subr.mxu0 %v886
        %1076 = vmatpush1.msra.mxu0 %v885
        %1077 = vmatprep.subr.mxu0 %v894
        %1078 = vmatpush1.msra.mxu0 %v893
        %1079 = vmatprep.subr.mxu0 %v902
        %1080 = vmatpush1.msra.mxu0 %v901
        %1081 = vmatprep.subr.mxu0 %v910
        %1082 = vmatpush1.msra.mxu0 %v909
        %1083 = vmatprep.subr.mxu0 %v918
        %1084 = vmatpush1.msra.mxu0 %v917
        %1085 = vmatprep.subr.mxu0 %v926
        %1086 = vmatpush1.msra.mxu0 %v925
        %1087 = vmatprep.subr.mxu0 %v934
        %1088 = vmatpush1.msra.mxu0 %v933
        %1089 = vmatprep.subr.mxu0 %v942
        %1090 = vmatpush1.msra.mxu0 %v941
        %1091 = vmatprep.subr.mxu0 %v950
        %1092 = vmatpush1.msra.mxu0 %v949
        %1093 = vmatprep.subr.mxu0 %v958
        %1094 = vmatpush1.msra.mxu0 %v957
        %1095 = vmatprep.subr.mxu0 %v966
        %1096 = vmatpush1.msra.mxu0 %v965
        %1097 = vmatprep.subr.mxu0 %v974
        %1098 = vmatpush1.msra.mxu0 %v973
        %1099 = vmatprep.subr.mxu0 %v982
        %1100 = vmatpush1.msra.mxu0 %v981
        %1101 = vmatprep.subr.mxu0 %v990
        %1102 = vmatpush1.msra.mxu0 %v989
        %1103 = vmatprep.subr.mxu0 %v998
        %1104 = vmatpush1.msra.mxu0 %v997
        %1105 = vmatprep.subr.mxu0 %v1006
        %1106 = vmatpush1.msra.mxu0 %v1005
        %1107 = vmatprep.subr.mxu0 %v1014
        %1108 = vmatpush1.msra.mxu0 %v1013
        %1109 = vmatprep.subr.mxu0 %v1022
        %1110 = vmatpush1.msra.mxu0 %v1021
        %1111 = vmatprep.subr.mxu0 %v1030
        %1112 = vmatpush1.msra.mxu0 %v1029
        %1113 = vmatprep.subr.mxu0 %v1038
        %1114 = vmatpush1.msra.mxu0 %v1037
        %1115 = vmatprep.subr.mxu0 %v1046
        %1116 = vmatpush1.msra.mxu0 %v1045
        %1117 = vmatprep.mubr.f32.mxu0 %v796
        %1118 = vmatmul.mubr.f32.gmra.mrb[0].mxu0 %v795
        %v1119 = vpop.f32.mrb[0].mxu0
        %v1120 = vadd.f32 0.0, %v1119
        %v1121 = vpop.f32.mrb[0].mxu0
        %v1122 = vadd.f32 0.0, %v1121
        %1123 = vdwg.mxu0
        %1124 = vmatprep.subr.mxu0 %v800
        %1125 = vmatpush1.msra.mxu0 %v799
        %1126 = vmatprep.subr.mxu0 %v808
        %1127 = vmatpush1.msra.mxu0 %v807
        %1128 = vmatprep.subr.mxu0 %v816
        %1129 = vmatpush1.msra.mxu0 %v815
        %1130 = vmatprep.subr.mxu0 %v824
        %1131 = vmatpush1.msra.mxu0 %v823
        %1132 = vmatprep.subr.mxu0 %v832
        %1133 = vmatpush1.msra.mxu0 %v831
        %1134 = vmatprep.subr.mxu0 %v840
        %1135 = vmatpush1.msra.mxu0 %v839
        %1136 = vmatprep.subr.mxu0 %v848
        %1137 = vmatpush1.msra.mxu0 %v847
        %1138 = vmatprep.subr.mxu0 %v856
        %1139 = vmatpush1.msra.mxu0 %v855
        %1140 = vmatprep.subr.mxu0 %v864
        %1141 = vmatpush1.msra.mxu0 %v863
        %1142 = vmatprep.subr.mxu0 %v872
        %1143 = vmatpush1.msra.mxu0 %v871
        %1144 = vmatprep.subr.mxu0 %v880
        %1145 = vmatpush1.msra.mxu0 %v879
        %1146 = vmatprep.subr.mxu0 %v888
        %1147 = vmatpush1.msra.mxu0 %v887
        %1148 = vmatprep.subr.mxu0 %v896
        %1149 = vmatpush1.msra.mxu0 %v895
        %1150 = vmatprep.subr.mxu0 %v904
        %1151 = vmatpush1.msra.mxu0 %v903
        %1152 = vmatprep.subr.mxu0 %v912
        %1153 = vmatpush1.msra.mxu0 %v911
        %1154 = vmatprep.subr.mxu0 %v920
        %1155 = vmatpush1.msra.mxu0 %v919
        %1156 = vmatprep.subr.mxu0 %v928
        %1157 = vmatpush1.msra.mxu0 %v927
        %1158 = vmatprep.subr.mxu0 %v936
        %1159 = vmatpush1.msra.mxu0 %v935
        %1160 = vmatprep.subr.mxu0 %v944
        %1161 = vmatpush1.msra.mxu0 %v943
        %1162 = vmatprep.subr.mxu0 %v952
        %1163 = vmatpush1.msra.mxu0 %v951
        %1164 = vmatprep.subr.mxu0 %v960
        %1165 = vmatpush1.msra.mxu0 %v959
        %1166 = vmatprep.subr.mxu0 %v968
        %1167 = vmatpush1.msra.mxu0 %v967
        %1168 = vmatprep.subr.mxu0 %v976
        %1169 = vmatpush1.msra.mxu0 %v975
        %1170 = vmatprep.subr.mxu0 %v984
        %1171 = vmatpush1.msra.mxu0 %v983
        %1172 = vmatprep.subr.mxu0 %v992
        %1173 = vmatpush1.msra.mxu0 %v991
        %1174 = vmatprep.subr.mxu0 %v1000
        %1175 = vmatpush1.msra.mxu0 %v999
        %1176 = vmatprep.subr.mxu0 %v1008
        %1177 = vmatpush1.msra.mxu0 %v1007
        %1178 = vmatprep.subr.mxu0 %v1016
        %1179 = vmatpush1.msra.mxu0 %v1015
        %1180 = vmatprep.subr.mxu0 %v1024
        %1181 = vmatpush1.msra.mxu0 %v1023
        %1182 = vmatprep.subr.mxu0 %v1032
        %1183 = vmatpush1.msra.mxu0 %v1031
        %1184 = vmatprep.subr.mxu0 %v1040
        %1185 = vmatpush1.msra.mxu0 %v1039
        %1186 = vmatprep.subr.mxu0 %v1048
        %1187 = vmatpush1.msra.mxu0 %v1047
        %1188 = vmatprep.mubr.f32.mxu0 %v796
        %1189 = vmatmul.mubr.f32.gmra.mrb[0].mxu0 %v795
        %v1190 = vpop.f32.mrb[0].mxu0
        %v1191 = vadd.f32 0.0, %v1190
        %v1192 = vpop.f32.mrb[0].mxu0
        %v1193 = vadd.f32 0.0, %v1192
        %1194 = vdwg.mxu0
        %1195 = vmatprep.subr.mxu0 %v802
        %1196 = vmatpush1.msra.mxu0 %v801
        %1197 = vmatprep.subr.mxu0 %v810
        %1198 = vmatpush1.msra.mxu0 %v809
        %1199 = vmatprep.subr.mxu0 %v818
        %1200 = vmatpush1.msra.mxu0 %v817
        %1201 = vmatprep.subr.mxu0 %v826
        %1202 = vmatpush1.msra.mxu0 %v825
        %1203 = vmatprep.subr.mxu0 %v834
        %1204 = vmatpush1.msra.mxu0 %v833
        %1205 = vmatprep.subr.mxu0 %v842
        %1206 = vmatpush1.msra.mxu0 %v841
        %1207 = vmatprep.subr.mxu0 %v850
        %1208 = vmatpush1.msra.mxu0 %v849
        %1209 = vmatprep.subr.mxu0 %v858
        %1210 = vmatpush1.msra.mxu0 %v857
        %1211 = vmatprep.subr.mxu0 %v866
        %1212 = vmatpush1.msra.mxu0 %v865
        %1213 = vmatprep.subr.mxu0 %v874
        %1214 = vmatpush1.msra.mxu0 %v873
        %1215 = vmatprep.subr.mxu0 %v882
        %1216 = vmatpush1.msra.mxu0 %v881
        %1217 = vmatprep.subr.mxu0 %v890
        %1218 = vmatpush1.msra.mxu0 %v889
        %1219 = vmatprep.subr.mxu0 %v898
        %1220 = vmatpush1.msra.mxu0 %v897
        %1221 = vmatprep.subr.mxu0 %v906
        %1222 = vmatpush1.msra.mxu0 %v905
        %1223 = vmatprep.subr.mxu0 %v914
        %1224 = vmatpush1.msra.mxu0 %v913
        %1225 = vmatprep.subr.mxu0 %v922
        %1226 = vmatpush1.msra.mxu0 %v921
        %1227 = vmatprep.subr.mxu0 %v930
        %1228 = vmatpush1.msra.mxu0 %v929
        %1229 = vmatprep.subr.mxu0 %v938
        %1230 = vmatpush1.msra.mxu0 %v937
        %1231 = vmatprep.subr.mxu0 %v946
        %1232 = vmatpush1.msra.mxu0 %v945
        %1233 = vmatprep.subr.mxu0 %v954
        %1234 = vmatpush1.msra.mxu0 %v953
        %1235 = vmatprep.subr.mxu0 %v962
        %1236 = vmatpush1.msra.mxu0 %v961
        %1237 = vmatprep.subr.mxu0 %v970
        %1238 = vmatpush1.msra.mxu0 %v969
        %1239 = vmatprep.subr.mxu0 %v978
        %1240 = vmatpush1.msra.mxu0 %v977
        %1241 = vmatprep.subr.mxu0 %v986
        %1242 = vmatpush1.msra.mxu0 %v985
        %1243 = vmatprep.subr.mxu0 %v994
        %1244 = vmatpush1.msra.mxu0 %v993
        %1245 = vmatprep.subr.mxu0 %v1002
        %1246 = vmatpush1.msra.mxu0 %v1001
        %1247 = vmatprep.subr.mxu0 %v1010
        %1248 = vmatpush1.msra.mxu0 %v1009
        %1249 = vmatprep.subr.mxu0 %v1018
        %1250 = vmatpush1.msra.mxu0 %v1017
        %1251 = vmatprep.subr.mxu0 %v1026
        %1252 = vmatpush1.msra.mxu0 %v1025
        %1253 = vmatprep.subr.mxu0 %v1034
        %1254 = vmatpush1.msra.mxu0 %v1033
        %1255 = vmatprep.subr.mxu0 %v1042
        %1256 = vmatpush1.msra.mxu0 %v1041
        %1257 = vmatprep.subr.mxu0 %v1050
        %1258 = vmatpush1.msra.mxu0 %v1049
        %1259 = vmatprep.mubr.f32.mxu0 %v796
        %1260 = vmatmul.mubr.f32.gmra.mrb[0].mxu0 %v795
        %v1261 = vpop.f32.mrb[0].mxu0
        %v1262 = vadd.f32 0.0, %v1261
        %v1263 = vpop.f32.mrb[0].mxu0
        %v1264 = vadd.f32 0.0, %v1263
        %1265 = vdwg.mxu0
        %1266 = vmatprep.subr.mxu0 %v804
        %1267 = vmatpush1.msra.mxu0 %v803
        %1268 = vmatprep.subr.mxu0 %v812
        %1269 = vmatpush1.msra.mxu0 %v811
        %1270 = vmatprep.subr.mxu0 %v820
        %1271 = vmatpush1.msra.mxu0 %v819
        %1272 = vmatprep.subr.mxu0 %v828
        %1273 = vmatpush1.msra.mxu0 %v827
        %1274 = vmatprep.subr.mxu0 %v836
        %1275 = vmatpush1.msra.mxu0 %v835
        %1276 = vmatprep.subr.mxu0 %v844
        %1277 = vmatpush1.msra.mxu0 %v843
        %1278 = vmatprep.subr.mxu0 %v852
        %1279 = vmatpush1.msra.mxu0 %v851
        %1280 = vmatprep.subr.mxu0 %v860
        %1281 = vmatpush1.msra.mxu0 %v859
        %1282 = vmatprep.subr.mxu0 %v868
        %1283 = vmatpush1.msra.mxu0 %v867
        %1284 = vmatprep.subr.mxu0 %v876
        %1285 = vmatpush1.msra.mxu0 %v875
        %1286 = vmatprep.subr.mxu0 %v884
        %1287 = vmatpush1.msra.mxu0 %v883
        %1288 = vmatprep.subr.mxu0 %v892
        %1289 = vmatpush1.msra.mxu0 %v891
        %1290 = vmatprep.subr.mxu0 %v900
        %1291 = vmatpush1.msra.mxu0 %v899
        %1292 = vmatprep.subr.mxu0 %v908
        %1293 = vmatpush1.msra.mxu0 %v907
        %1294 = vmatprep.subr.mxu0 %v916
        %1295 = vmatpush1.msra.mxu0 %v915
        %1296 = vmatprep.subr.mxu0 %v924
        %1297 = vmatpush1.msra.mxu0 %v923
        %1298 = vmatprep.subr.mxu0 %v932
        %1299 = vmatpush1.msra.mxu0 %v931
        %1300 = vmatprep.subr.mxu0 %v940
        %1301 = vmatpush1.msra.mxu0 %v939
        %1302 = vmatprep.subr.mxu0 %v948
        %1303 = vmatpush1.msra.mxu0 %v947
        %1304 = vmatprep.subr.mxu0 %v956
        %1305 = vmatpush1.msra.mxu0 %v955
        %1306 = vmatprep.subr.mxu0 %v964
        %1307 = vmatpush1.msra.mxu0 %v963
        %1308 = vmatprep.subr.mxu0 %v972
        %1309 = vmatpush1.msra.mxu0 %v971
        %1310 = vmatprep.subr.mxu0 %v980
        %1311 = vmatpush1.msra.mxu0 %v979
        %1312 = vmatprep.subr.mxu0 %v988
        %1313 = vmatpush1.msra.mxu0 %v987
        %1314 = vmatprep.subr.mxu0 %v996
        %1315 = vmatpush1.msra.mxu0 %v995
        %1316 = vmatprep.subr.mxu0 %v1004
        %1317 = vmatpush1.msra.mxu0 %v1003
        %1318 = vmatprep.subr.mxu0 %v1012
        %1319 = vmatpush1.msra.mxu0 %v1011
        %1320 = vmatprep.subr.mxu0 %v1020
        %1321 = vmatpush1.msra.mxu0 %v1019
        %1322 = vmatprep.subr.mxu0 %v1028
        %1323 = vmatpush1.msra.mxu0 %v1027
        %1324 = vmatprep.subr.mxu0 %v1036
        %1325 = vmatpush1.msra.mxu0 %v1035
        %1326 = vmatprep.subr.mxu0 %v1044
        %1327 = vmatpush1.msra.mxu0 %v1043
        %1328 = vmatprep.subr.mxu0 %v1052
        %1329 = vmatpush1.msra.mxu0 %v1051
        %1330 = vmatprep.mubr.f32.mxu0 %v796
        %1331 = vmatmul.mubr.f32.gmra.mrb[0].mxu0 %v795
        %v1332 = vpop.f32.mrb[0].mxu0
        %v1333 = vadd.f32 0.0, %v1332
        %v1334 = vpop.f32.mrb[0].mxu0
        %v1335 = vadd.f32 0.0, %v1334
        %1336 = vdwg.mxu0
        %1337 = vst [vmem:[%s172] sm:$0xff] %v1120
        %1338 = vst [vmem:[%s172 + $0x8] sm:$0xff] %v1122
        %1339 = vst [vmem:[%s172 + $0x10] sm:$0xff] %v1191
        %1340 = vst [vmem:[%s172 + $0x18] sm:$0xff] %v1193
        %1341 = vst [vmem:[%s172 + $0x20] sm:$0xff] %v1262
        %1342 = vst [vmem:[%s172 + $0x28] sm:$0xff] %v1264
        %1343 = vst [vmem:[%s172 + $0x30] sm:$0xff] %v1333
        %1344 = vst [vmem:[%s172 + $0x38] sm:$0xff] %v1335
        %s1345 = sand.u32 %s75, 1
        %s1346 = scalar_lea.sflag [#allocation5], %s1345
        %s1347 = sand.u32 %s75, 1
        %s1348 = smul.addr %s1347, 64
        %s1349 = scalar_lea.vmem [#allocation8], %s1348
        // Predicated region
        $region37: #{tpu_custom_call.1} parent=27 // pred_check
          %p1350 = pneg %p85
        $region38: #{tpu_custom_call.1} parent=27 // pred_check_branch
          %1352 = sbr.rel (%p1350) target = $region40
        $region39: #{tpu_custom_call.1} parent=27 // pred_region
          %s1354 = ssub.s32 1024, 1024
          %1355 = vsyncadd %s1346, %s1354
          %s1356 = smul.addr %s20, 8
          %s1357 = smul.addr %s1356, 128
          %s1358 = scalar_lea.hbm %s2, %s1357
          %s1360 = sshll.u32 %s1349, 4
          %s1361 = int_to_ptr.vmem [resolvable:$true] %s1360
          %1363 = dma.vmem_to_hbm [thread:$0]  %s1361, 1024, %s1358, %s1346
        $region40: #{tpu_custom_call.1} parent=27 // pred_fallthru
          _
      $region28: #{tpu_custom_call.1} parent=5 // pred_fallthru
        _
      %p1364 = scmp.le.s32.totalorder 2, %s15
      // Predicated region
      $region41: #{tpu_custom_call.1} parent=5 // pred_check
        %p1365 = pneg %p1364
      $region42: #{tpu_custom_call.1} parent=5 // pred_check_branch
        %1367 = sbr.rel (%p1365) target = $region44
      $region43: #{tpu_custom_call.1} parent=5 // pred_region
        %s1368 = ssub.s32 %s15, 2
        // Predicated region
        $region45: #{tpu_custom_call.1} parent=43 // pred_check
          %p1369 = pneg %p91
        $region46: #{tpu_custom_call.1} parent=43 // pred_check_branch
          %1371 = sbr.rel (%p1369) target = $region48
        $region47: #{tpu_custom_call.1} parent=43 // pred_region
          %s1372 = sand.u32 %s76, 1
          %s1373 = scalar_lea.sflag [#allocation5], %s1372
          %s1374 = sand.u32 %s76, 1
          %s1375 = smul.addr %s1374, 64
          %s1376 = scalar_lea.vmem [#allocation8], %s1375
          %1377 = dma.done %s1373, 1024
        $region48: #{tpu_custom_call.1} parent=43 // pred_fallthru
          _
      $region44: #{tpu_custom_call.1} parent=5 // pred_fallthru
        _
    $region6: #{tpu_custom_call.1} parent=1 // loop_footer
      %s19 = sadd.s32 1, %s15
    $region7: #{tpu_custom_call.1} parent=1 // loop_footer_branch
      %14 = sbr.rel target = $region3
    $region8: #{tpu_custom_call.1} parent=1 // loop_exit
      _
    %1378 = vsyncpa [#allocation4], 1
    %s1379 = scalar_lea.sflag [#allocation4], 1
    %1380 = vsyncpa %s1379, 1
    %1381 = vsyncpa [#allocation7], 1
    %1382 = vsyncpa [#allocation5], 1
    %s1383 = scalar_lea.sflag [#allocation5], 1
    %1384 = vsyncpa %s1383, 1

</llo_original>
